<compile_context>
chip_gen: v6e
topology: v6e:2x2x1
jax: 0.10.0
libtpu: 0.0.40
codegen_flags: <defaults>
</compile_context>

<pallas_src>
import jax
import jax.numpy as jnp
from jax.experimental import pallas as pl
from jax.experimental.pallas import tpu as pltpu

_LANE = 128
_CHUNK = 8  # output staging chunk; matches the (8, 128) sublane tiling


def _round_up(x, m):
    return ((x + m - 1) // m) * m


def _make_hmm_kernel(t_block, n_pad, m_obs):
    def kernel(x_ref, expET_ref, expAT_ref, pi_ref, out_ref,
               emis_scr, s_carry, c_carry):
        """One grid step == one (batch block, time block).

        x_ref     : (t_block, B_blk) int32      observation ids
        expET_ref : (M, N_pad) f32              expET[m, i] = E[i, m]      (resident)
        expAT_ref : (N_pad, N_pad) f32          expAT[k, i] = A[i, k]      (resident)
        pi_ref    : (1, N_pad) f32              initial state probabilities (resident)
        out_ref   : (B_blk, t_block, N_pad) f32 log_alpha slab
        emis_scr  : (t_block, B_blk, N_pad) f32 hoisted emission probabilities
        s_carry   : (B_blk, N_pad) f32          scaled alpha  exp(alpha - c)
        c_carry   : (B_blk, N_pad) f32          running log scale (lane-broadcast)
        """
        tb = pl.program_id(1)           # time-block index (innermost, sequential)
        b_blk = out_ref.shape[0]

        @pl.when(tb == 0)
        def _init():
            s_carry[...] = jnp.broadcast_to(pi_ref[...], (b_blk, n_pad))
            c_carry[...] = jnp.zeros((b_blk, n_pad), jnp.float32)

        # ---- Hoisted emission lookup for the whole time block (off the chain):
        #   emisE[t, b, i] = E[i, x[b, t]]   via  one_hot(x) @ exp(log_E).T  (MXU)
        # TODO(synk): for large alphabets (M >> N) replace the one-hot matmul by a
        # DMA/row gather and keep the emission table in HBM instead of VMEM.
        x_blk = x_ref[...]                                          # (t_block, B_blk)
        iota_m = jax.lax.broadcasted_iota(jnp.int32, (t_block, b_blk, m_obs), 2)
        onehot = (x_blk[:, :, None] == iota_m).astype(jnp.float32)  # (t_block, B_blk, M)
        emisE = jnp.dot(onehot.reshape(t_block * b_blk, m_obs), expET_ref[...],
                        preferred_element_type=jnp.float32)         # (t_block*B_blk, N_pad)
        emis_scr[...] = emisE.reshape(t_block, b_blk, n_pad)

        expAT = expAT_ref[...]                                      # (N_pad, N_pad)
        s = s_carry[...]                                            # (B_blk, N_pad)
        c = c_carry[...]                                            # (B_blk, N_pad)
        is_first = tb == 0

        # Statically unrolled time loop; outputs staged and stored once per
        # 8-step chunk so every store is a full (8, 128)-tile, lane-dense write.
        for c0 in range(0, t_block, _CHUNK):
            outs = []
            for tt in range(c0, c0 + _CHUNK):
                # Transition in probability space (scaled forward):
                #   q[b, i] = sum_k A[i, k] * s[b, k]
                q = jnp.dot(s, expAT, preferred_element_type=jnp.float32)
                if tt == 0:
                    # Global t == 0: alpha_0 = emis_0 + log_pi (s holds pi probs).
                    q = jnp.where(is_first, s, q)
                u = emis_scr[tt] * q                                # (B_blk, N_pad)

                # Output log_alpha (does not feed the recurrence -> hideable).
                outs.append(c + jnp.log(u))

                # Rescale the carry.  Using the *same* r in both updates makes
                # the bookkeeping exact regardless of the reciprocal accuracy.
                m = jnp.max(u, axis=-1, keepdims=True)              # (B_blk, 1)
                r = pl.reciprocal(m, approx=True)
                s = u * r
                c = c - jnp.log(r)

            out_ref[:, c0:c0 + _CHUNK, :] = jnp.concatenate(
                [a[:, None, :] for a in outs], axis=1)

        s_carry[...] = s
        c_carry[...] = c

    return kernel


def _default_batch_blocks(batch):
    # Only v7x has 2 TensorCores per chip; on v5e/v6e splitting the batch just
    # doubles the number of sequential grid steps.
    try:
        kind = jax.devices()[0].device_kind.lower()
    except Exception:
        kind = ""
    if "v7" in kind and batch % 2 == 0 and batch >= 16:
        return 2
    return 1


def hmm_forward(x, pi, unnorm_trans, unnorm_emis, *, t_block=None, batch_blocks=None):
    """Pallas HMM forward pass (== PyTorch HMM.forward output).

    x            : int32 (batch, T_max) observation indices
    pi           : float32 (N,)      unnormalized log state priors
    unnorm_trans : float32 (N, N)    unnormalized transition logits
    unnorm_emis  : float32 (N, M)    unnormalized emission logits
    Returns      : float32 (batch, T_max, N)
    """
    B, T_max = x.shape
    N = pi.shape[0]
    M = unnorm_emis.shape[1]
    N_pad = _round_up(N, _LANE)

    # Parameter prep (glue, plain JAX on tiny tensors).
    log_pi = jax.nn.log_softmax(pi.astype(jnp.float32))
    log_A = jax.nn.log_softmax(unnorm_trans.astype(jnp.float32), axis=1)
    log_E = jax.nn.log_softmax(unnorm_emis.astype(jnp.float32), axis=1)

    # Resident exp-space tables, state axis zero-padded to the lane width.
    expET = jnp.zeros((M, N_pad), jnp.float32).at[:, :N].set(jnp.exp(log_E).T)
    expAT = jnp.zeros((N_pad, N_pad), jnp.float32).at[:N, :N].set(jnp.exp(log_A).T)
    pi_p = jnp.zeros((1, N_pad), jnp.float32).at[0, :N].set(jnp.exp(log_pi))

    # Batch blocking (>= 2 only on v7x; must divide the batch).
    if batch_blocks is None:
        batch_blocks = _default_batch_blocks(B)
    n_b = batch_blocks if (batch_blocks >= 1 and B % batch_blocks == 0) else 1
    B_blk = B // n_b

    # Time blocking; block is statically unrolled in-kernel, keep it modest.
    if t_block is None:
        t_block = min(32, _round_up(T_max, _CHUNK))
    t_block = max(_CHUNK, _round_up(t_block, _CHUNK))

    # VMEM budget (v7x has 64 MiB per TC; v5e/v6e 128 MiB).
    try:
        vmem_cap = int(getattr(pltpu.get_tpu_info(), "vmem_capacity_bytes", 64 << 20))
    except Exception:
        vmem_cap = 64 << 20
    budget = int(0.6 * vmem_cap)

    def _vmem_need(tb):
        x_blk = tb * B_blk * 4
        out_blk = B_blk * tb * N_pad * 4
        tables = (M * N_pad + N_pad * N_pad + N_pad) * 4
        scratch = (tb * B_blk * N_pad + 2 * B_blk * N_pad) * 4
        return 2 * (x_blk + out_blk + tables) + scratch   # inputs/outputs double-buffered

    while t_block > _CHUNK and _vmem_need(t_block) > budget:
        t_block -= _CHUNK

    T_pad = _round_up(T_max, t_block)
    n_t = T_pad // t_block

    # Observations: (n_b, T_pad, B_blk) — time on sublanes, batch on lanes.
    # Padding uses index 0 (harmless; padded outputs are sliced off).
    x_pad = jnp.pad(x.astype(jnp.int32), ((0, 0), (0, T_pad - T_max)))
    x_r = jnp.transpose(x_pad.reshape(n_b, B_blk, T_pad), (0, 2, 1))

    need = _vmem_need(t_block)
    vmem_limit_bytes = int(min(max(32 << 20, need + (8 << 20)), int(0.8 * vmem_cap)))

    flops = 2 * B * T_pad * N_pad * (N_pad + M)
    transcendentals = 2 * B * T_pad * N_pad
    bytes_accessed = (x_r.size * 4 + B * T_pad * N_pad * 4
                      + (M * N_pad + N_pad * N_pad + N_pad) * 4)

    grid_spec = pltpu.PrefetchScalarGridSpec(
        num_scalar_prefetch=0,
        grid=(n_b, n_t),
        in_specs=[
            pl.BlockSpec((None, t_block, B_blk), lambda b, t: (b, t, 0)),   # x
            pl.BlockSpec((M, N_pad), lambda b, t: (0, 0)),                  # expET
            pl.BlockSpec((N_pad, N_pad), lambda b, t: (0, 0)),              # expAT
            pl.BlockSpec((1, N_pad), lambda b, t: (0, 0)),                  # pi probs
        ],
        out_specs=pl.BlockSpec((B_blk, t_block, N_pad), lambda b, t: (b, t, 0)),
        scratch_shapes=[
            pltpu.VMEM((t_block, B_blk, N_pad), jnp.float32),   # hoisted emissions
            pltpu.VMEM((B_blk, N_pad), jnp.float32),            # s carry
            pltpu.VMEM((B_blk, N_pad), jnp.float32),            # c carry
        ],
    )

    out = pl.pallas_call(
        _make_hmm_kernel(t_block, N_pad, M),
        out_shape=jax.ShapeDtypeStruct((B, T_pad, N_pad), jnp.float32),
        grid_spec=grid_spec,
        compiler_params=pltpu.CompilerParams(
            dimension_semantics=("parallel", "arbitrary"),  # batch ||, time sequential
            vmem_limit_bytes=vmem_limit_bytes,
        ),
        cost_estimate=pl.CostEstimate(
            flops=int(flops),
            transcendentals=int(transcendentals),
            bytes_accessed=int(bytes_accessed),
        ),
    )(x_r, expET, expAT, pi_p)

    return out[:, :T_max, :N]


def _hmm_forward_ref(x, pi, unnorm_trans, unnorm_emis):
    """Pure-JAX reference (mirrors PyTorch HMM.forward exactly)."""
    log_pi = jax.nn.log_softmax(pi)
    log_A = jax.nn.log_softmax(unnorm_trans, axis=1)
    log_E = jax.nn.log_softmax(unnorm_emis, axis=1)
    logB = jnp.transpose(log_E, (1, 0))[x]          # (B, T_max, N)

    alpha0 = logB[:, 0, :] + log_pi                 # (B, N)

    def step(prev, logB_t):
        s = prev[:, None, :] + log_A[None, :, :]    # (B, N_i, N_k)
        trans = jax.scipy.special.logsumexp(s, axis=-1)
        alpha = logB_t + trans
        return alpha, alpha

    _, alphas = jax.lax.scan(step, alpha0, jnp.transpose(logB, (1, 0, 2))[1:])
    return jnp.concatenate([alpha0[:, None, :], jnp.transpose(alphas, (1, 0, 2))],
                           axis=1)


if __name__ == "__main__":
    batch_size = 4
    T_max = 8
    num_states = 8
    num_observations = 16

    key = jax.random.PRNGKey(0)
    k_trans, k_emis, k_x = jax.random.split(key, 3)

    # Deterministic parameter init mirroring the module's __init__ shapes.
    pi = jnp.zeros((num_states,), dtype=jnp.float32)                        # torch.zeros(N)
    unnorm_trans = jax.random.normal(k_trans, (num_states, num_states),
                                     dtype=jnp.float32)                     # randn(N, N)
    unnorm_emis = jax.random.normal(k_emis, (num_states, num_observations),
                                    dtype=jnp.float32)                      # randn(N, M)

    x = jax.random.randint(k_x, (batch_size, T_max), 0, num_observations,
                           dtype=jnp.int32)
    T = jnp.full((batch_size,), T_max, dtype=jnp.int32)  # lengths; forward() ignores them

    log_alpha = jax.block_until_ready(hmm_forward(x, pi, unnorm_trans, unnorm_emis))

    ref = _hmm_forward_ref(x, pi, unnorm_trans, unnorm_emis)
    assert log_alpha.shape == (batch_size, T_max, num_states)
    assert bool(jnp.allclose(log_alpha, ref, rtol=1e-3, atol=1e-3)), (
        "mismatch vs pure-JAX reference")

    print("KERNEL_OK")
</pallas_src>

<mosaic_0001>
module attributes {stable_mosaic.version = 11 : i64} {
  func.func @kernel(%arg0: i32, %arg1: i32, %arg2: memref<1x8x4xi32, #tpu.memory_space<vmem>>, %arg3: memref<16x128xf32, #tpu.memory_space<vmem>>, %arg4: memref<128x128xf32, #tpu.memory_space<vmem>>, %arg5: memref<1x128xf32, #tpu.memory_space<vmem>>, %arg6: memref<4x8x128xf32, #tpu.memory_space<vmem>>, %arg7: memref<8x4x128xf32, #tpu.memory_space<vmem>>, %arg8: memref<4x128xf32, #tpu.memory_space<vmem>>, %arg9: memref<4x128xf32, #tpu.memory_space<vmem>>) attributes {dimension_semantics = [#tpu.dimension_semantics<parallel>, #tpu.dimension_semantics<arbitrary>], iteration_bounds = array<i64: 1, 1>, scalar_prefetch = 0 : i64, scratch_operands = 3 : i64, tpu.core_type = #tpu.core_type<tc>, window_params = [{transform_indices = @transform_0, window_bounds = array<i64: 1, 8, 4>}, {pipeline_mode = #tpu.pipeline_mode<synchronous>, transform_indices = @transform_1, window_bounds = array<i64: 16, 128>}, {pipeline_mode = #tpu.pipeline_mode<synchronous>, transform_indices = @transform_2, window_bounds = array<i64: 128, 128>}, {pipeline_mode = #tpu.pipeline_mode<synchronous>, transform_indices = @transform_3, window_bounds = array<i64: 1, 128>}, {transform_indices = @transform_4, window_bounds = array<i64: 4, 8, 128>}]} {
    %c0_i32 = arith.constant 0 : i32
    %0 = arith.cmpi eq, %arg1, %c0_i32 : i32
    %1 = arith.extui %0 : i1 to i32
    %c0_i32_0 = arith.constant 0 : i32
    %2 = arith.cmpi ne, %1, %c0_i32_0 : i32
    scf.if %2 {
      %c0_55 = arith.constant 0 : index
      %c0_56 = arith.constant 0 : index
      %145 = vector.load %arg5[%c0_55, %c0_56] : memref<1x128xf32, #tpu.memory_space<vmem>>, vector<1x128xf32>
      %146 = vector.shape_cast %145 : vector<1x128xf32> to vector<1x128xf32>
      %147 = vector.broadcast %146 : vector<1x128xf32> to vector<4x128xf32>
      %c0_57 = arith.constant 0 : index
      %c0_58 = arith.constant 0 : index
      %148 = vector.load %arg8[%c0_57, %c0_58] : memref<4x128xf32, #tpu.memory_space<vmem>>, vector<4x128xf32>
      tpu.vector_store %arg8[%c0_57, %c0_58], %147 {strides = array<i32>} : memref<4x128xf32, #tpu.memory_space<vmem>>, vector<4x128xf32>,
      %cst_59 = arith.constant 0.000000e+00 : f32
      %149 = vector.broadcast %cst_59 : f32 to vector<4x128xf32>
      %c0_60 = arith.constant 0 : index
      %c0_61 = arith.constant 0 : index
      %150 = vector.load %arg9[%c0_60, %c0_61] : memref<4x128xf32, #tpu.memory_space<vmem>>, vector<4x128xf32>
      tpu.vector_store %arg9[%c0_60, %c0_61], %149 {strides = array<i32>} : memref<4x128xf32, #tpu.memory_space<vmem>>, vector<4x128xf32>,
    } else {
    }
    %c0 = arith.constant 0 : index
    %c0_1 = arith.constant 0 : index
    %c0_2 = arith.constant 0 : index
    %3 = vector.load %arg2[%c0, %c0_1, %c0_2] : memref<1x8x4xi32, #tpu.memory_space<vmem>>, vector<1x8x4xi32>
    %4 = vector.shape_cast %3 : vector<1x8x4xi32> to vector<8x4xi32>
    %5 = tpu.iota {dimensions = array<i32: 2>} : vector<8x4x16xi32>
    %6 = vector.shape_cast %4 : vector<8x4xi32> to vector<8x4x1xi32>
    %7 = vector.broadcast %6 : vector<8x4x1xi32> to vector<8x4x16xi32>
    %8 = arith.cmpi eq, %7, %5 : vector<8x4x16xi32>
    %9 = arith.extui %8 : vector<8x4x16xi1> to vector<8x4x16xi32>
    %10 = arith.sitofp %9 : vector<8x4x16xi32> to vector<8x4x16xf32>
    %11 = vector.shape_cast %10 : vector<8x4x16xf32> to vector<32x16xf32>
    %c0_3 = arith.constant 0 : index
    %c0_4 = arith.constant 0 : index
    %12 = vector.load %arg3[%c0_3, %c0_4] : memref<16x128xf32, #tpu.memory_space<vmem>>, vector<16x128xf32>
    %cst = arith.constant dense<0.000000e+00> : vector<32x128xf32>
    %13 = tpu.matmul %11, %12, %cst {dimension_numbers = #tpu.dot_dimension_numbers<[1], [0], [0], [1], [0, 0, 1, 1], [], []>} : vector<32x16xf32>, vector<16x128xf32>, vector<32x128xf32> -> vector<32x128xf32>
    %14 = vector.shape_cast %13 : vector<32x128xf32> to vector<8x4x128xf32>
    %c0_5 = arith.constant 0 : index
    %c0_6 = arith.constant 0 : index
    %c0_7 = arith.constant 0 : index
    %15 = vector.load %arg7[%c0_5, %c0_6, %c0_7] : memref<8x4x128xf32, #tpu.memory_space<vmem>>, vector<8x4x128xf32>
    tpu.vector_store %arg7[%c0_5, %c0_6, %c0_7], %14 {strides = array<i32>} : memref<8x4x128xf32, #tpu.memory_space<vmem>>, vector<8x4x128xf32>,
    %c0_8 = arith.constant 0 : index
    %c0_9 = arith.constant 0 : index
    %16 = vector.load %arg4[%c0_8, %c0_9] : memref<128x128xf32, #tpu.memory_space<vmem>>, vector<128x128xf32>
    %c0_10 = arith.constant 0 : index
    %c0_11 = arith.constant 0 : index
    %17 = vector.load %arg8[%c0_10, %c0_11] : memref<4x128xf32, #tpu.memory_space<vmem>>, vector<4x128xf32>
    %c0_12 = arith.constant 0 : index
    %c0_13 = arith.constant 0 : index
    %18 = vector.load %arg9[%c0_12, %c0_13] : memref<4x128xf32, #tpu.memory_space<vmem>>, vector<4x128xf32>
    %c0_i32_14 = arith.constant 0 : i32
    %19 = arith.cmpi eq, %arg1, %c0_i32_14 : i32
    %cst_15 = arith.constant dense<0.000000e+00> : vector<4x128xf32>
    %20 = tpu.matmul %17, %16, %cst_15 {dimension_numbers = #tpu.dot_dimension_numbers<[1], [0], [0], [1], [0, 0, 1, 1], [], []>} : vector<4x128xf32>, vector<128x128xf32>, vector<4x128xf32> -> vector<4x128xf32>
    %21 = arith.select %19, %17, %20 : vector<4x128xf32>
    %c0_16 = arith.constant 0 : index
    %c0_17 = arith.constant 0 : index
    %c0_18 = arith.constant 0 : index
    %22 = vector.load %arg7[%c0_16, %c0_17, %c0_18] : memref<8x4x128xf32, #tpu.memory_space<vmem>>, vector<1x4x128xf32>
    %23 = vector.shape_cast %22 : vector<1x4x128xf32> to vector<4x128xf32>
    %24 = arith.mulf %23, %21 : vector<4x128xf32>
    %25 = math.log %24 : vector<4x128xf32>
    %26 = arith.addf %18, %25 : vector<4x128xf32>
    %cst_19 = arith.constant dense<0xFF800000> : vector<4xf32>
    %27 = vector.multi_reduction <maximumf>, %24, %cst_19 [1] : vector<4x128xf32> to vector<4xf32>
    %28 = vector.shape_cast %27 : vector<4xf32> to vector<4x1xf32>
    %29 = tpu.reciprocal %28 {approx = true} : vector<4x1xf32> -> vector<4x1xf32>
    %30 = vector.broadcast %29 : vector<4x1xf32> to vector<4x128xf32>
    %31 = arith.mulf %24, %30 : vector<4x128xf32>
    %32 = math.log %29 : vector<4x1xf32>
    %33 = vector.broadcast %32 : vector<4x1xf32> to vector<4x128xf32>
    %34 = arith.subf %18, %33 : vector<4x128xf32>
    %cst_20 = arith.constant dense<0.000000e+00> : vector<4x128xf32>
    %35 = tpu.matmul %31, %16, %cst_20 {dimension_numbers = #tpu.dot_dimension_numbers<[1], [0], [0], [1], [0, 0, 1, 1], [], []>} : vector<4x128xf32>, vector<128x128xf32>, vector<4x128xf32> -> vector<4x128xf32>
    %c1 = arith.constant 1 : index
    %c0_21 = arith.constant 0 : index
    %c0_22 = arith.constant 0 : index
    %36 = vector.load %arg7[%c1, %c0_21, %c0_22] : memref<8x4x128xf32, #tpu.memory_space<vmem>>, vector<1x4x128xf32>
    %37 = vector.shape_cast %36 : vector<1x4x128xf32> to vector<4x128xf32>
    %38 = arith.mulf %37, %35 : vector<4x128xf32>
    %39 = math.log %38 : vector<4x128xf32>
    %40 = arith.addf %34, %39 : vector<4x128xf32>
    %cst_23 = arith.constant dense<0xFF800000> : vector<4xf32>
    %41 = vector.multi_reduction <maximumf>, %38, %cst_23 [1] : vector<4x128xf32> to vector<4xf32>
    %42 = vector.shape_cast %41 : vector<4xf32> to vector<4x1xf32>
    %43 = tpu.reciprocal %42 {approx = true} : vector<4x1xf32> -> vector<4x1xf32>
    %44 = vector.broadcast %43 : vector<4x1xf32> to vector<4x128xf32>
    %45 = arith.mulf %38, %44 : vector<4x128xf32>
    %46 = math.log %43 : vector<4x1xf32>
    %47 = vector.broadcast %46 : vector<4x1xf32> to vector<4x128xf32>
    %48 = arith.subf %34, %47 : vector<4x128xf32>
    %cst_24 = arith.constant dense<0.000000e+00> : vector<4x128xf32>
    %49 = tpu.matmul %45, %16, %cst_24 {dimension_numbers = #tpu.dot_dimension_numbers<[1], [0], [0], [1], [0, 0, 1, 1], [], []>} : vector<4x128xf32>, vector<128x128xf32>, vector<4x128xf32> -> vector<4x128xf32>
    %c2 = arith.constant 2 : index
    %c0_25 = arith.constant 0 : index
    %c0_26 = arith.constant 0 : index
    %50 = vector.load %arg7[%c2, %c0_25, %c0_26] : memref<8x4x128xf32, #tpu.memory_space<vmem>>, vector<1x4x128xf32>
    %51 = vector.shape_cast %50 : vector<1x4x128xf32> to vector<4x128xf32>
    %52 = arith.mulf %51, %49 : vector<4x128xf32>
    %53 = math.log %52 : vector<4x128xf32>
    %54 = arith.addf %48, %53 : vector<4x128xf32>
    %cst_27 = arith.constant dense<0xFF800000> : vector<4xf32>
    %55 = vector.multi_reduction <maximumf>, %52, %cst_27 [1] : vector<4x128xf32> to vector<4xf32>
    %56 = vector.shape_cast %55 : vector<4xf32> to vector<4x1xf32>
    %57 = tpu.reciprocal %56 {approx = true} : vector<4x1xf32> -> vector<4x1xf32>
    %58 = vector.broadcast %57 : vector<4x1xf32> to vector<4x128xf32>
    %59 = arith.mulf %52, %58 : vector<4x128xf32>
    %60 = math.log %57 : vector<4x1xf32>
    %61 = vector.broadcast %60 : vector<4x1xf32> to vector<4x128xf32>
    %62 = arith.subf %48, %61 : vector<4x128xf32>
    %cst_28 = arith.constant dense<0.000000e+00> : vector<4x128xf32>
    %63 = tpu.matmul %59, %16, %cst_28 {dimension_numbers = #tpu.dot_dimension_numbers<[1], [0], [0], [1], [0, 0, 1, 1], [], []>} : vector<4x128xf32>, vector<128x128xf32>, vector<4x128xf32> -> vector<4x128xf32>
    %c3 = arith.constant 3 : index
    %c0_29 = arith.constant 0 : index
    %c0_30 = arith.constant 0 : index
    %64 = vector.load %arg7[%c3, %c0_29, %c0_30] : memref<8x4x128xf32, #tpu.memory_space<vmem>>, vector<1x4x128xf32>
    %65 = vector.shape_cast %64 : vector<1x4x128xf32> to vector<4x128xf32>
    %66 = arith.mulf %65, %63 : vector<4x128xf32>
    %67 = math.log %66 : vector<4x128xf32>
    %68 = arith.addf %62, %67 : vector<4x128xf32>
    %cst_31 = arith.constant dense<0xFF800000> : vector<4xf32>
    %69 = vector.multi_reduction <maximumf>, %66, %cst_31 [1] : vector<4x128xf32> to vector<4xf32>
    %70 = vector.shape_cast %69 : vector<4xf32> to vector<4x1xf32>
    %71 = tpu.reciprocal %70 {approx = true} : vector<4x1xf32> -> vector<4x1xf32>
    %72 = vector.broadcast %71 : vector<4x1xf32> to vector<4x128xf32>
    %73 = arith.mulf %66, %72 : vector<4x128xf32>
    %74 = math.log %71 : vector<4x1xf32>
    %75 = vector.broadcast %74 : vector<4x1xf32> to vector<4x128xf32>
    %76 = arith.subf %62, %75 : vector<4x128xf32>
    %cst_32 = arith.constant dense<0.000000e+00> : vector<4x128xf32>
    %77 = tpu.matmul %73, %16, %cst_32 {dimension_numbers = #tpu.dot_dimension_numbers<[1], [0], [0], [1], [0, 0, 1, 1], [], []>} : vector<4x128xf32>, vector<128x128xf32>, vector<4x128xf32> -> vector<4x128xf32>
    %c4 = arith.constant 4 : index
    %c0_33 = arith.constant 0 : index
    %c0_34 = arith.constant 0 : index
    %78 = vector.load %arg7[%c4, %c0_33, %c0_34] : memref<8x4x128xf32, #tpu.memory_space<vmem>>, vector<1x4x128xf32>
    %79 = vector.shape_cast %78 : vector<1x4x128xf32> to vector<4x128xf32>
    %80 = arith.mulf %79, %77 : vector<4x128xf32>
    %81 = math.log %80 : vector<4x128xf32>
    %82 = arith.addf %76, %81 : vector<4x128xf32>
    %cst_35 = arith.constant dense<0xFF800000> : vector<4xf32>
    %83 = vector.multi_reduction <maximumf>, %80, %cst_35 [1] : vector<4x128xf32> to vector<4xf32>
    %84 = vector.shape_cast %83 : vector<4xf32> to vector<4x1xf32>
    %85 = tpu.reciprocal %84 {approx = true} : vector<4x1xf32> -> vector<4x1xf32>
    %86 = vector.broadcast %85 : vector<4x1xf32> to vector<4x128xf32>
    %87 = arith.mulf %80, %86 : vector<4x128xf32>
    %88 = math.log %85 : vector<4x1xf32>
    %89 = vector.broadcast %88 : vector<4x1xf32> to vector<4x128xf32>
    %90 = arith.subf %76, %89 : vector<4x128xf32>
    %cst_36 = arith.constant dense<0.000000e+00> : vector<4x128xf32>
    %91 = tpu.matmul %87, %16, %cst_36 {dimension_numbers = #tpu.dot_dimension_numbers<[1], [0], [0], [1], [0, 0, 1, 1], [], []>} : vector<4x128xf32>, vector<128x128xf32>, vector<4x128xf32> -> vector<4x128xf32>
    %c5 = arith.constant 5 : index
    %c0_37 = arith.constant 0 : index
    %c0_38 = arith.constant 0 : index
    %92 = vector.load %arg7[%c5, %c0_37, %c0_38] : memref<8x4x128xf32, #tpu.memory_space<vmem>>, vector<1x4x128xf32>
    %93 = vector.shape_cast %92 : vector<1x4x128xf32> to vector<4x128xf32>
    %94 = arith.mulf %93, %91 : vector<4x128xf32>
    %95 = math.log %94 : vector<4x128xf32>
    %96 = arith.addf %90, %95 : vector<4x128xf32>
    %cst_39 = arith.constant dense<0xFF800000> : vector<4xf32>
    %97 = vector.multi_reduction <maximumf>, %94, %cst_39 [1] : vector<4x128xf32> to vector<4xf32>
    %98 = vector.shape_cast %97 : vector<4xf32> to vector<4x1xf32>
    %99 = tpu.reciprocal %98 {approx = true} : vector<4x1xf32> -> vector<4x1xf32>
    %100 = vector.broadcast %99 : vector<4x1xf32> to vector<4x128xf32>
    %101 = arith.mulf %94, %100 : vector<4x128xf32>
    %102 = math.log %99 : vector<4x1xf32>
    %103 = vector.broadcast %102 : vector<4x1xf32> to vector<4x128xf32>
    %104 = arith.subf %90, %103 : vector<4x128xf32>
    %cst_40 = arith.constant dense<0.000000e+00> : vector<4x128xf32>
    %105 = tpu.matmul %101, %16, %cst_40 {dimension_numbers = #tpu.dot_dimension_numbers<[1], [0], [0], [1], [0, 0, 1, 1], [], []>} : vector<4x128xf32>, vector<128x128xf32>, vector<4x128xf32> -> vector<4x128xf32>
    %c6 = arith.constant 6 : index
    %c0_41 = arith.constant 0 : index
    %c0_42 = arith.constant 0 : index
    %106 = vector.load %arg7[%c6, %c0_41, %c0_42] : memref<8x4x128xf32, #tpu.memory_space<vmem>>, vector<1x4x128xf32>
    %107 = vector.shape_cast %106 : vector<1x4x128xf32> to vector<4x128xf32>
    %108 = arith.mulf %107, %105 : vector<4x128xf32>
    %109 = math.log %108 : vector<4x128xf32>
    %110 = arith.addf %104, %109 : vector<4x128xf32>
    %cst_43 = arith.constant dense<0xFF800000> : vector<4xf32>
    %111 = vector.multi_reduction <maximumf>, %108, %cst_43 [1] : vector<4x128xf32> to vector<4xf32>
    %112 = vector.shape_cast %111 : vector<4xf32> to vector<4x1xf32>
    %113 = tpu.reciprocal %112 {approx = true} : vector<4x1xf32> -> vector<4x1xf32>
    %114 = vector.broadcast %113 : vector<4x1xf32> to vector<4x128xf32>
    %115 = arith.mulf %108, %114 : vector<4x128xf32>
    %116 = math.log %113 : vector<4x1xf32>
    %117 = vector.broadcast %116 : vector<4x1xf32> to vector<4x128xf32>
    %118 = arith.subf %104, %117 : vector<4x128xf32>
    %cst_44 = arith.constant dense<0.000000e+00> : vector<4x128xf32>
    %119 = tpu.matmul %115, %16, %cst_44 {dimension_numbers = #tpu.dot_dimension_numbers<[1], [0], [0], [1], [0, 0, 1, 1], [], []>} : vector<4x128xf32>, vector<128x128xf32>, vector<4x128xf32> -> vector<4x128xf32>
    %c7 = arith.constant 7 : index
    %c0_45 = arith.constant 0 : index
    %c0_46 = arith.constant 0 : index
    %120 = vector.load %arg7[%c7, %c0_45, %c0_46] : memref<8x4x128xf32, #tpu.memory_space<vmem>>, vector<1x4x128xf32>
    %121 = vector.shape_cast %120 : vector<1x4x128xf32> to vector<4x128xf32>
    %122 = arith.mulf %121, %119 : vector<4x128xf32>
    %123 = math.log %122 : vector<4x128xf32>
    %124 = arith.addf %118, %123 : vector<4x128xf32>
    %cst_47 = arith.constant dense<0xFF800000> : vector<4xf32>
    %125 = vector.multi_reduction <maximumf>, %122, %cst_47 [1] : vector<4x128xf32> to vector<4xf32>
    %126 = vector.shape_cast %125 : vector<4xf32> to vector<4x1xf32>
    %127 = tpu.reciprocal %126 {approx = true} : vector<4x1xf32> -> vector<4x1xf32>
    %128 = vector.broadcast %127 : vector<4x1xf32> to vector<4x128xf32>
    %129 = arith.mulf %122, %128 : vector<4x128xf32>
    %130 = math.log %127 : vector<4x1xf32>
    %131 = vector.broadcast %130 : vector<4x1xf32> to vector<4x128xf32>
    %132 = arith.subf %118, %131 : vector<4x128xf32>
    %133 = vector.shape_cast %26 : vector<4x128xf32> to vector<4x1x128xf32>
    %134 = vector.shape_cast %40 : vector<4x128xf32> to vector<4x1x128xf32>
    %135 = vector.shape_cast %54 : vector<4x128xf32> to vector<4x1x128xf32>
    %136 = vector.shape_cast %68 : vector<4x128xf32> to vector<4x1x128xf32>
    %137 = vector.shape_cast %82 : vector<4x128xf32> to vector<4x1x128xf32>
    %138 = vector.shape_cast %96 : vector<4x128xf32> to vector<4x1x128xf32>
    %139 = vector.shape_cast %110 : vector<4x128xf32> to vector<4x1x128xf32>
    %140 = vector.shape_cast %124 : vector<4x128xf32> to vector<4x1x128xf32>
    %141 = tpu.concatenate %133, %134, %135, %136, %137, %138, %139, %140 in 1 : vector<4x1x128xf32>, vector<4x1x128xf32>, vector<4x1x128xf32>, vector<4x1x128xf32>, vector<4x1x128xf32>, vector<4x1x128xf32>, vector<4x1x128xf32>, vector<4x1x128xf32> -> vector<4x8x128xf32>
    %c0_48 = arith.constant 0 : index
    %c0_49 = arith.constant 0 : index
    %c0_50 = arith.constant 0 : index
    %142 = vector.load %arg6[%c0_48, %c0_49, %c0_50] : memref<4x8x128xf32, #tpu.memory_space<vmem>>, vector<4x8x128xf32>
    tpu.vector_store %arg6[%c0_48, %c0_49, %c0_50], %141 {strides = array<i32>} : memref<4x8x128xf32, #tpu.memory_space<vmem>>, vector<4x8x128xf32>,
    %c0_51 = arith.constant 0 : index
    %c0_52 = arith.constant 0 : index
    %143 = vector.load %arg8[%c0_51, %c0_52] : memref<4x128xf32, #tpu.memory_space<vmem>>, vector<4x128xf32>
    tpu.vector_store %arg8[%c0_51, %c0_52], %129 {strides = array<i32>} : memref<4x128xf32, #tpu.memory_space<vmem>>, vector<4x128xf32>,
    %c0_53 = arith.constant 0 : index
    %c0_54 = arith.constant 0 : index
    %144 = vector.load %arg9[%c0_53, %c0_54] : memref<4x128xf32, #tpu.memory_space<vmem>>, vector<4x128xf32>
    tpu.vector_store %arg9[%c0_53, %c0_54], %132 {strides = array<i32>} : memref<4x128xf32, #tpu.memory_space<vmem>>, vector<4x128xf32>,
    return
  }
  func.func @transform_0(%arg0: i32, %arg1: i32) -> (i32, i32, i32) {
    %c0_i32 = arith.constant 0 : i32
    %c0_i32_0 = arith.constant 0 : i32
    return %arg0, %arg1, %c0_i32 : i32, i32, i32
  }
  func.func @transform_1(%arg0: i32, %arg1: i32) -> (i32, i32) {
    %c0_i32 = arith.constant 0 : i32
    %c0_i32_0 = arith.constant 0 : i32
    %c0_i32_1 = arith.constant 0 : i32
    return %c0_i32, %c0_i32_0 : i32, i32
  }
  func.func @transform_2(%arg0: i32, %arg1: i32) -> (i32, i32) {
    %c0_i32 = arith.constant 0 : i32
    %c0_i32_0 = arith.constant 0 : i32
    %c0_i32_1 = arith.constant 0 : i32
    return %c0_i32, %c0_i32_0 : i32, i32
  }
  func.func @transform_3(%arg0: i32, %arg1: i32) -> (i32, i32) {
    %c0_i32 = arith.constant 0 : i32
    %c0_i32_0 = arith.constant 0 : i32
    %c0_i32_1 = arith.constant 0 : i32
    return %c0_i32, %c0_i32_0 : i32, i32
  }
  func.func @transform_4(%arg0: i32, %arg1: i32) -> (i32, i32, i32) {
    %c0_i32 = arith.constant 0 : i32
    %c0_i32_0 = arith.constant 0 : i32
    return %arg0, %arg1, %c0_i32 : i32, i32, i32
  }
}

</mosaic_0001>

<llo_original>
// kernel: tpu_custom_call.1
$region0: #{tpu_custom_call.1}
  #allocation0 [shape = 'u32[]', space=smem, size = 0x4, offset = 0x4, fixed_abs, tag = 'smem constant byte address 0x4 - core index']
  #allocation1 [shape = 'u32[144,128]{1,0:T(1,128)}', space=vmem, size = 0x12000, scoped, tag = 'internal scratch']
  #allocation2 [shape = 'f32[8,4,128]{2,1,0:T(4,128)}', space=vmem, size = 0x4000, scoped, tag = 'scratch operand']
  #allocation3 [shape = 'f32[4,128]{1,0:T(4,128)}', space=vmem, size = 0x800, scoped, tag = 'scratch operand']
  #allocation4 [shape = 'f32[4,128]{1,0:T(4,128)}', space=vmem, size = 0x800, scoped, tag = 'scratch operand']
  %s0 = inlined_call_operand.vmem [shape: s32[1,8,4], index: 0, kind: input, shape index: {}]
  %s1 = inlined_call_operand.hbm [shape: f32[16,128], index: 1, kind: input, shape index: {}]
  %s2 = inlined_call_operand.hbm [shape: f32[128,128], index: 2, kind: input, shape index: {}]
  %s3 = inlined_call_operand.vmem [shape: f32[1,128], index: 3, kind: input, shape index: {}]
  %s4 = inlined_call_operand.hbm [shape: f32[4,8,128], index: 4, kind: output, shape index: {}]
  %s5 = sld [smem:[#allocation0]]
  $region38: #{tpu_custom_call.1} parent=0
    _
  %s7 = ssub.s32 1, %s5
  %s8 = scalar_select 0, %s7, %s5
  $region1: #{tpu_custom_call.1} parent=0
    #allocation5 [shape = 'u8[8192]{0}', space=vmem, size = 0x2000, scoped, tag = 'input window, operand 1, single buffered']
    #allocation6 [shape = 's32[1]{0}', space=sflag, size = 0x4, scoped, tag = 'scoped memory for tpu_custom_call.1']
    #allocation7 [shape = 's32[1]{0}', space=sflag, size = 0x4, scoped, tag = 'scoped memory for tpu_custom_call.1']
    #allocation8 [shape = 'u8[65536]{0}', space=vmem, size = 0x10000, scoped, tag = 'input window, operand 2, single buffered']
    #allocation9 [shape = 's32[1]{0}', space=sflag, size = 0x4, scoped, tag = 'scoped memory for tpu_custom_call.1']
    #allocation10 [shape = 'u8[16384]{0}', space=vmem, size = 0x4000, scoped, tag = 'output window, operand 0, single buffered']
    %9 = vsyncpa [#allocation6], 0
    %10 = vsyncpa [#allocation9], 0
    %11 = vsyncpa [#allocation7], 0
    // Predicated region
    $region2: #{tpu_custom_call.1} parent=1 // pred_check
      _
    $region3: #{tpu_custom_call.1} parent=1 // pred_check_branch
      %13 = sbr.rel (0) target = $region5
    $region4: #{tpu_custom_call.1} parent=1 // pred_region
      _
    $region5: #{tpu_custom_call.1} parent=1 // pred_fallthru
      _
    // Predicated region
    $region6: #{tpu_custom_call.1} parent=1 // pred_check
      _
    $region7: #{tpu_custom_call.1} parent=1 // pred_check_branch
      %15 = sbr.rel (0) target = $region9
    $region8: #{tpu_custom_call.1} parent=1 // pred_region
      %s17 = ssub.s32 256, 256
      %18 = vsyncadd [#allocation6], %s17
      %s19 = sshll.u32 [#allocation5], 4
      %s20 = int_to_ptr.vmem [resolvable:$true] %s19
      %25 = dma.hbm_to_vmem [thread:$0]  %s1, 256, %s20, [#allocation6], 128, 128, 8
    $region9: #{tpu_custom_call.1} parent=1 // pred_fallthru
      _
    // Predicated region
    $region10: #{tpu_custom_call.1} parent=1 // pred_check
      _
    $region11: #{tpu_custom_call.1} parent=1 // pred_check_branch
      %27 = sbr.rel (0) target = $region13
    $region12: #{tpu_custom_call.1} parent=1 // pred_region
      %s29 = ssub.s32 2048, 2048
      %30 = vsyncadd [#allocation9], %s29
      %s31 = sshll.u32 [#allocation8], 4
      %s32 = int_to_ptr.vmem [resolvable:$true] %s31
      %37 = dma.hbm_to_vmem [thread:$0]  %s2, 2048, %s32, [#allocation9], 128, 128, 8
    $region13: #{tpu_custom_call.1} parent=1 // pred_fallthru
      _
    // Predicated region
    $region14: #{tpu_custom_call.1} parent=1 // pred_check
      _
    $region15: #{tpu_custom_call.1} parent=1 // pred_check_branch
      %39 = sbr.rel (0) target = $region17
    $region16: #{tpu_custom_call.1} parent=1 // pred_region
      _
    $region17: #{tpu_custom_call.1} parent=1 // pred_fallthru
      _
    // Predicated region
    $region18: #{tpu_custom_call.1} parent=1 // pred_check
      _
    $region19: #{tpu_custom_call.1} parent=1 // pred_check_branch
      %41 = sbr.rel (0) target = $region21
    $region20: #{tpu_custom_call.1} parent=1 // pred_region
      %42 = dma.done [#allocation6], 256
    $region21: #{tpu_custom_call.1} parent=1 // pred_fallthru
      _
    // Predicated region
    $region22: #{tpu_custom_call.1} parent=1 // pred_check
      _
    $region23: #{tpu_custom_call.1} parent=1 // pred_check_branch
      %44 = sbr.rel (0) target = $region25
    $region24: #{tpu_custom_call.1} parent=1 // pred_region
      %45 = dma.done [#allocation9], 2048
    $region25: #{tpu_custom_call.1} parent=1 // pred_fallthru
      _
    %p46 = scmp.eq.s32.totalorder 0, 0
    // Predicated region
    $region26: #{tpu_custom_call.1} parent=1 // pred_check
      %p47 = pneg %p46
    $region27: #{tpu_custom_call.1} parent=1 // pred_check_branch
      %49 = sbr.rel (%p47) target = $region29
    $region28: #{tpu_custom_call.1} parent=1 // pred_region
      %v50 = vld [vmem:[%s3] sm:$0x1]
      %v52 = vlaneseq
      %v53 = vshrl.u32 %v52, 7
      %v54 = vsub.s32 0, %v53
      %v55 = vrot.slane %v50, %v54
      %57 = vst [vmem:[#allocation3] sm:$0xf] %v55
      %58 = vst [vmem:[#allocation4] sm:$0xf] 0.0
    $region29: #{tpu_custom_call.1} parent=1 // pred_fallthru
      _
    %v59 = vld [vmem:[%s0] sm:$0xff]
    %v60 = vlaneseq
    %v61 = vand.u32 %v60, 127
    %v62 = vlaneseq
    %v63 = vshrl.u32 %v62, 7
    %v64 = vsub.s32 0, %v63
    %v65 = vrot.slane %v59, %v64
    %67 = vbcast.lane.b32.xlu0 %v65, 256
    %v68 = vpop.permute.xlu0 %67
    %v69 = vlaneseq
    %v70 = vshrl.u32 %v69, 7
    %v71 = vsub.s32 1, %v70
    %v72 = vrot.slane %v59, %v71
    %74 = vbcast.lane.b32.xlu0 %v72, 256
    %v75 = vpop.permute.xlu0 %74
    %v76 = vlaneseq
    %v77 = vshrl.u32 %v76, 7
    %v78 = vsub.s32 2, %v77
    %v79 = vrot.slane %v59, %v78
    %81 = vbcast.lane.b32.xlu0 %v79, 256
    %v82 = vpop.permute.xlu0 %81
    %v83 = vlaneseq
    %v84 = vshrl.u32 %v83, 7
    %v85 = vsub.s32 3, %v84
    %v86 = vrot.slane %v59, %v85
    %88 = vbcast.lane.b32.xlu0 %v86, 256
    %v89 = vpop.permute.xlu0 %88
    %v90 = vlaneseq
    %v91 = vshrl.u32 %v90, 7
    %v92 = vsub.s32 4, %v91
    %v93 = vrot.slane %v59, %v92
    %95 = vbcast.lane.b32.xlu0 %v93, 256
    %v96 = vpop.permute.xlu0 %95
    %v97 = vlaneseq
    %v98 = vshrl.u32 %v97, 7
    %v99 = vsub.s32 5, %v98
    %v100 = vrot.slane %v59, %v99
    %102 = vbcast.lane.b32.xlu0 %v100, 256
    %v103 = vpop.permute.xlu0 %102
    %v104 = vlaneseq
    %v105 = vshrl.u32 %v104, 7
    %v106 = vsub.s32 6, %v105
    %v107 = vrot.slane %v59, %v106
    %109 = vbcast.lane.b32.xlu0 %v107, 256
    %v110 = vpop.permute.xlu0 %109
    %v111 = vlaneseq
    %v112 = vshrl.u32 %v111, 7
    %v113 = vsub.s32 7, %v112
    %v114 = vrot.slane %v59, %v113
    %116 = vbcast.lane.b32.xlu0 %v114, 256
    %v117 = vpop.permute.xlu0 %116
    %vm118 = vcmp.eq.s32.totalorder %v68, %v61
    %vm119 = vcmp.eq.s32.totalorder %v75, %v61
    %vm120 = vcmp.eq.s32.totalorder %v82, %v61
    %vm121 = vcmp.eq.s32.totalorder %v89, %v61
    %vm122 = vcmp.eq.s32.totalorder %v96, %v61
    %vm123 = vcmp.eq.s32.totalorder %v103, %v61
    %vm124 = vcmp.eq.s32.totalorder %v110, %v61
    %vm125 = vcmp.eq.s32.totalorder %v117, %v61
    %v126 = vsel %vm118, 1, 0
    %v127 = vsel %vm119, 1, 0
    %v128 = vsel %vm120, 1, 0
    %v129 = vsel %vm121, 1, 0
    %v130 = vsel %vm122, 1, 0
    %v131 = vsel %vm123, 1, 0
    %v132 = vsel %vm124, 1, 0
    %v133 = vsel %vm125, 1, 0
    %v134 = vcvt.s32.f32 %v126
    %v135 = vcvt.s32.f32 %v127
    %v136 = vcvt.s32.f32 %v128
    %v137 = vcvt.s32.f32 %v129
    %v138 = vcvt.s32.f32 %v130
    %v139 = vcvt.s32.f32 %v131
    %v140 = vcvt.s32.f32 %v132
    %v141 = vcvt.s32.f32 %v133
    %v142 = vld [vmem:[#allocation5] sm:$0xff]
    %v143 = vld [vmem:[#allocation5 + $0x8] sm:$0xff]
    %v152 = vcombine.low %v134, %v135
    %v153 = vcombine.low %v136, %v137
    %v154 = vcombine.low %v138, %v139
    %v155 = vcombine.low %v140, %v141
    %vm156 = vcmask 130048
    %v157 = vsel %vm156, %v152, 0
    %v159 = vsel %vm156, %v153, 0
    %v161 = vsel %vm156, %v154, 0
    %v163 = vsel %vm156, %v155, 0
    %165 = vmatprep.subr.mxu0 0.0
    %166 = vmatpush1.msra.mxu0 0.0
    %167 = vmatprep.subr.mxu0 0.0
    %168 = vmatpush1.msra.mxu0 0.0
    %169 = vmatprep.subr.mxu0 0.0
    %170 = vmatpush1.msra.mxu0 0.0
    %171 = vmatprep.subr.mxu0 0.0
    %172 = vmatpush1.msra.mxu0 0.0
    %173 = vmatprep.subr.mxu0 0.0
    %174 = vmatpush1.msra.mxu0 0.0
    %175 = vmatprep.subr.mxu0 0.0
    %176 = vmatpush1.msra.mxu0 0.0
    %177 = vmatprep.subr.mxu0 0.0
    %178 = vmatpush1.msra.mxu0 0.0
    %179 = vmatprep.subr.mxu0 0.0
    %180 = vmatpush1.msra.mxu0 0.0
    %181 = vmatprep.subr.mxu0 0.0
    %182 = vmatpush1.msra.mxu0 0.0
    %183 = vmatprep.subr.mxu0 0.0
    %184 = vmatpush1.msra.mxu0 0.0
    %185 = vmatprep.subr.mxu0 0.0
    %186 = vmatpush1.msra.mxu0 0.0
    %187 = vmatprep.subr.mxu0 0.0
    %188 = vmatpush1.msra.mxu0 0.0
    %189 = vmatprep.subr.mxu0 0.0
    %190 = vmatpush1.msra.mxu0 0.0
    %191 = vmatprep.subr.mxu0 0.0
    %192 = vmatpush1.msra.mxu0 0.0
    %193 = vmatprep.subr.mxu0 0.0
    %194 = vmatpush1.msra.mxu0 %v143
    %195 = vmatprep.subr.mxu0 0.0
    %196 = vmatpush1.msra.mxu0 %v142
    %197 = vmatprep.subr.mxu0 0.0
    %198 = vmatpush2.msra.mxu0 0.0
    %199 = vmatprep.subr.mxu0 0.0
    %200 = vmatpush2.msra.mxu0 0.0
    %201 = vmatprep.subr.mxu0 0.0
    %202 = vmatpush2.msra.mxu0 0.0
    %203 = vmatprep.subr.mxu0 0.0
    %204 = vmatpush2.msra.mxu0 0.0
    %205 = vmatprep.subr.mxu0 0.0
    %206 = vmatpush2.msra.mxu0 0.0
    %207 = vmatprep.subr.mxu0 0.0
    %208 = vmatpush2.msra.mxu0 0.0
    %209 = vmatprep.subr.mxu0 0.0
    %210 = vmatpush2.msra.mxu0 0.0
    %211 = vmatprep.subr.mxu0 0.0
    %212 = vmatpush2.msra.mxu0 0.0
    %213 = vmatprep.subr.mxu0 0.0
    %214 = vmatpush2.msra.mxu0 0.0
    %215 = vmatprep.subr.mxu0 0.0
    %216 = vmatpush2.msra.mxu0 0.0
    %217 = vmatprep.subr.mxu0 0.0
    %218 = vmatpush2.msra.mxu0 0.0
    %219 = vmatprep.subr.mxu0 0.0
    %220 = vmatpush2.msra.mxu0 0.0
    %221 = vmatprep.subr.mxu0 0.0
    %222 = vmatpush2.msra.mxu0 0.0
    %223 = vmatprep.subr.mxu0 0.0
    %224 = vmatpush2.msra.mxu0 0.0
    %225 = vmatprep.subr.mxu0 0.0
    %226 = vmatpush2.msra.mxu0 0.0
    %227 = vmatprep.subr.mxu0 0.0
    %228 = vmatpush2.msra.mxu0 0.0
    %229 = vmatprep.mubr.f32.mxu0 0.0
    %230 = vmatmul.mubr.f32.gmra.mxu0 %v157
    %v231 = vpop.f32.mrf.mxu0
    %v232 = vadd.f32 0.0, %v231
    %v233 = vpop.f32.mrf.mxu0
    %234 = vmatprep.mubr.f32.mxu0 0.0
    %235 = vmatmul.mubr.f32.gmra.mxu0 %v159
    %v236 = vpop.f32.mrf.mxu0
    %v237 = vadd.f32 0.0, %v236
    %v238 = vpop.f32.mrf.mxu0
    %239 = vmatprep.mubr.f32.mxu0 0.0
    %240 = vmatmul.mubr.f32.gmra.mxu0 %v161
    %v241 = vpop.f32.mrf.mxu0
    %v242 = vadd.f32 0.0, %v241
    %v243 = vpop.f32.mrf.mxu0
    %244 = vmatprep.mubr.f32.mxu0 0.0
    %245 = vmatmul.mubr.f32.gmra.mxu0 %v163
    %v246 = vpop.f32.mrf.mxu0
    %v247 = vadd.f32 0.0, %v246
    %v248 = vpop.f32.mrf.mxu0
    %249 = vdwg.mxu0
    %v254 = vcombine.high %v232, %v232
    %v255 = vcombine.high %v237, %v237
    %v256 = vcombine.high %v242, %v242
    %v257 = vcombine.high %v247, %v247
    %262 = vst [vmem:[#allocation2] sm:$0xf] %v232
    %263 = vst [vmem:[#allocation2 + $0x4] sm:$0xf] %v254
    %264 = vst [vmem:[#allocation2 + $0x8] sm:$0xf] %v237
    %265 = vst [vmem:[#allocation2 + $0xc] sm:$0xf] %v255
    %266 = vst [vmem:[#allocation2 + $0x10] sm:$0xf] %v242
    %267 = vst [vmem:[#allocation2 + $0x14] sm:$0xf] %v256
    %268 = vst [vmem:[#allocation2 + $0x18] sm:$0xf] %v247
    %269 = vst [vmem:[#allocation2 + $0x1c] sm:$0xf] %v257
    %v270 = vld [vmem:[#allocation8] sm:$0xff]
    %v271 = vld [vmem:[#allocation8 + $0x8] sm:$0xff]
    %v272 = vld [vmem:[#allocation8 + $0x10] sm:$0xff]
    %v273 = vld [vmem:[#allocation8 + $0x18] sm:$0xff]
    %v274 = vld [vmem:[#allocation8 + $0x20] sm:$0xff]
    %v275 = vld [vmem:[#allocation8 + $0x28] sm:$0xff]
    %v276 = vld [vmem:[#allocation8 + $0x30] sm:$0xff]
    %v277 = vld [vmem:[#allocation8 + $0x38] sm:$0xff]
    %v278 = vld [vmem:[#allocation8 + $0x40] sm:$0xff]
    %v279 = vld [vmem:[#allocation8 + $0x48] sm:$0xff]
    %v280 = vld [vmem:[#allocation8 + $0x50] sm:$0xff]
    %v281 = vld [vmem:[#allocation8 + $0x58] sm:$0xff]
    %v282 = vld [vmem:[#allocation8 + $0x60] sm:$0xff]
    %v283 = vld [vmem:[#allocation8 + $0x68] sm:$0xff]
    %v284 = vld [vmem:[#allocation8 + $0x70] sm:$0xff]
    %v285 = vld [vmem:[#allocation8 + $0x78] sm:$0xff]
    %v286 = vld [vmem:[#allocation3] sm:$0xf]
    %v287 = vld [vmem:[#allocation4] sm:$0xf]
    %288 = vmatprep.subr.mxu0 0.0
    %289 = vmatpush1.msra.mxu0 %v285
    %290 = vmatprep.subr.mxu0 0.0
    %291 = vmatpush1.msra.mxu0 %v284
    %292 = vmatprep.subr.mxu0 0.0
    %293 = vmatpush1.msra.mxu0 %v283
    %294 = vmatprep.subr.mxu0 0.0
    %295 = vmatpush1.msra.mxu0 %v282
    %296 = vmatprep.subr.mxu0 0.0
    %297 = vmatpush1.msra.mxu0 %v281
    %298 = vmatprep.subr.mxu0 0.0
    %299 = vmatpush1.msra.mxu0 %v280
    %300 = vmatprep.subr.mxu0 0.0
    %301 = vmatpush1.msra.mxu0 %v279
    %302 = vmatprep.subr.mxu0 0.0
    %303 = vmatpush1.msra.mxu0 %v278
    %304 = vmatprep.subr.mxu0 0.0
    %305 = vmatpush1.msra.mxu0 %v277
    %306 = vmatprep.subr.mxu0 0.0
    %307 = vmatpush1.msra.mxu0 %v276
    %308 = vmatprep.subr.mxu0 0.0
    %309 = vmatpush1.msra.mxu0 %v275
    %310 = vmatprep.subr.mxu0 0.0
    %311 = vmatpush1.msra.mxu0 %v274
    %312 = vmatprep.subr.mxu0 0.0
    %313 = vmatpush1.msra.mxu0 %v273
    %314 = vmatprep.subr.mxu0 0.0
    %315 = vmatpush1.msra.mxu0 %v272
    %316 = vmatprep.subr.mxu0 0.0
    %317 = vmatpush1.msra.mxu0 %v271
    %318 = vmatprep.subr.mxu0 0.0
    %319 = vmatpush1.msra.mxu0 %v270
    %320 = vmatprep.subr.mxu0 0.0
    %321 = vmatpush2.msra.mxu0 0.0
    %322 = vmatprep.subr.mxu0 0.0
    %323 = vmatpush2.msra.mxu0 0.0
    %324 = vmatprep.subr.mxu0 0.0
    %325 = vmatpush2.msra.mxu0 0.0
    %326 = vmatprep.subr.mxu0 0.0
    %327 = vmatpush2.msra.mxu0 0.0
    %328 = vmatprep.subr.mxu0 0.0
    %329 = vmatpush2.msra.mxu0 0.0
    %330 = vmatprep.subr.mxu0 0.0
    %331 = vmatpush2.msra.mxu0 0.0
    %332 = vmatprep.subr.mxu0 0.0
    %333 = vmatpush2.msra.mxu0 0.0
    %334 = vmatprep.subr.mxu0 0.0
    %335 = vmatpush2.msra.mxu0 0.0
    %336 = vmatprep.subr.mxu0 0.0
    %337 = vmatpush2.msra.mxu0 0.0
    %338 = vmatprep.subr.mxu0 0.0
    %339 = vmatpush2.msra.mxu0 0.0
    %340 = vmatprep.subr.mxu0 0.0
    %341 = vmatpush2.msra.mxu0 0.0
    %342 = vmatprep.subr.mxu0 0.0
    %343 = vmatpush2.msra.mxu0 0.0
    %344 = vmatprep.subr.mxu0 0.0
    %345 = vmatpush2.msra.mxu0 0.0
    %346 = vmatprep.subr.mxu0 0.0
    %347 = vmatpush2.msra.mxu0 0.0
    %348 = vmatprep.subr.mxu0 0.0
    %349 = vmatpush2.msra.mxu0 0.0
    %350 = vmatprep.subr.mxu0 0.0
    %351 = vmatpush2.msra.mxu0 0.0
    %352 = vmatprep.mubr.f32.mxu0 0.0
    %353 = vmatmul.mubr.f32.gmra.mxu0 %v286
    %v354 = vpop.f32.mrf.mxu0
    %v355 = vadd.f32 0.0, %v354
    %v356 = vpop.f32.mrf.mxu0
    %357 = vdwg.mxu0
    %s358 = scalar_select %p46, 1, 0
    %v359 = vstv %s358
    %vm360 = vcmp.eq.s32.totalorder %v359, 1
    %v361 = vsel %vm360, %v286, %v355
    %v362 = vld [vmem:[#allocation2] sm:$0xf]
    %v363 = vmul.f32 %v362, %v361
    %v364 = vlog2.pop %v363
    %v365 = vmul.f32 %v364, 0.6931472
    %v366 = vadd.f32 %v287, %v365
    %vm367 = vcmask 1043456
    %v368 = vsel %vm367, %v363, -inf
    %369 = vmax.xlane.f32.xlu0 %v368
    %v370 = vpop.xlane.xlu0 %369
    %v371 = vrcp.pop %v370
    %v372 = vmul.f32 %v363, %v371
    %v373 = vlog2.pop %v371
    %v374 = vmul.f32 %v373, 0.6931472
    %v375 = vsub.f32 %v287, %v374
    %376 = vmatprep.subr.mxu0 0.0
    %377 = vmatpush1.msra.mxu0 %v285
    %378 = vmatprep.subr.mxu0 0.0
    %379 = vmatpush1.msra.mxu0 %v284
    %380 = vmatprep.subr.mxu0 0.0
    %381 = vmatpush1.msra.mxu0 %v283
    %382 = vmatprep.subr.mxu0 0.0
    %383 = vmatpush1.msra.mxu0 %v282
    %384 = vmatprep.subr.mxu0 0.0
    %385 = vmatpush1.msra.mxu0 %v281
    %386 = vmatprep.subr.mxu0 0.0
    %387 = vmatpush1.msra.mxu0 %v280
    %388 = vmatprep.subr.mxu0 0.0
    %389 = vmatpush1.msra.mxu0 %v279
    %390 = vmatprep.subr.mxu0 0.0
    %391 = vmatpush1.msra.mxu0 %v278
    %392 = vmatprep.subr.mxu0 0.0
    %393 = vmatpush1.msra.mxu0 %v277
    %394 = vmatprep.subr.mxu0 0.0
    %395 = vmatpush1.msra.mxu0 %v276
    %396 = vmatprep.subr.mxu0 0.0
    %397 = vmatpush1.msra.mxu0 %v275
    %398 = vmatprep.subr.mxu0 0.0
    %399 = vmatpush1.msra.mxu0 %v274
    %400 = vmatprep.subr.mxu0 0.0
    %401 = vmatpush1.msra.mxu0 %v273
    %402 = vmatprep.subr.mxu0 0.0
    %403 = vmatpush1.msra.mxu0 %v272
    %404 = vmatprep.subr.mxu0 0.0
    %405 = vmatpush1.msra.mxu0 %v271
    %406 = vmatprep.subr.mxu0 0.0
    %407 = vmatpush1.msra.mxu0 %v270
    %408 = vmatprep.subr.mxu0 0.0
    %409 = vmatpush2.msra.mxu0 0.0
    %410 = vmatprep.subr.mxu0 0.0
    %411 = vmatpush2.msra.mxu0 0.0
    %412 = vmatprep.subr.mxu0 0.0
    %413 = vmatpush2.msra.mxu0 0.0
    %414 = vmatprep.subr.mxu0 0.0
    %415 = vmatpush2.msra.mxu0 0.0
    %416 = vmatprep.subr.mxu0 0.0
    %417 = vmatpush2.msra.mxu0 0.0
    %418 = vmatprep.subr.mxu0 0.0
    %419 = vmatpush2.msra.mxu0 0.0
    %420 = vmatprep.subr.mxu0 0.0
    %421 = vmatpush2.msra.mxu0 0.0
    %422 = vmatprep.subr.mxu0 0.0
    %423 = vmatpush2.msra.mxu0 0.0
    %424 = vmatprep.subr.mxu0 0.0
    %425 = vmatpush2.msra.mxu0 0.0
    %426 = vmatprep.subr.mxu0 0.0
    %427 = vmatpush2.msra.mxu0 0.0
    %428 = vmatprep.subr.mxu0 0.0
    %429 = vmatpush2.msra.mxu0 0.0
    %430 = vmatprep.subr.mxu0 0.0
    %431 = vmatpush2.msra.mxu0 0.0
    %432 = vmatprep.subr.mxu0 0.0
    %433 = vmatpush2.msra.mxu0 0.0
    %434 = vmatprep.subr.mxu0 0.0
    %435 = vmatpush2.msra.mxu0 0.0
    %436 = vmatprep.subr.mxu0 0.0
    %437 = vmatpush2.msra.mxu0 0.0
    %438 = vmatprep.subr.mxu0 0.0
    %439 = vmatpush2.msra.mxu0 0.0
    %440 = vmatprep.mubr.f32.mxu0 0.0
    %441 = vmatmul.mubr.f32.gmra.mxu0 %v372
    %v442 = vpop.f32.mrf.mxu0
    %v443 = vadd.f32 0.0, %v442
    %v444 = vpop.f32.mrf.mxu0
    %445 = vdwg.mxu0
    %s446 = scalar_lea.vmem [#allocation2], 4
    %v447 = vld [vmem:[%s446] sm:$0xf]
    %v448 = vmul.f32 %v447, %v443
    %v449 = vlog2.pop %v448
    %v450 = vmul.f32 %v449, 0.6931472
    %v451 = vadd.f32 %v375, %v450
    %v452 = vsel %vm367, %v448, -inf
    %453 = vmax.xlane.f32.xlu0 %v452
    %v454 = vpop.xlane.xlu0 %453
    %v455 = vrcp.pop %v454
    %v456 = vmul.f32 %v448, %v455
    %v457 = vlog2.pop %v455
    %v458 = vmul.f32 %v457, 0.6931472
    %v459 = vsub.f32 %v375, %v458
    %460 = vmatprep.subr.mxu0 0.0
    %461 = vmatpush1.msra.mxu0 %v285
    %462 = vmatprep.subr.mxu0 0.0
    %463 = vmatpush1.msra.mxu0 %v284
    %464 = vmatprep.subr.mxu0 0.0
    %465 = vmatpush1.msra.mxu0 %v283
    %466 = vmatprep.subr.mxu0 0.0
    %467 = vmatpush1.msra.mxu0 %v282
    %468 = vmatprep.subr.mxu0 0.0
    %469 = vmatpush1.msra.mxu0 %v281
    %470 = vmatprep.subr.mxu0 0.0
    %471 = vmatpush1.msra.mxu0 %v280
    %472 = vmatprep.subr.mxu0 0.0
    %473 = vmatpush1.msra.mxu0 %v279
    %474 = vmatprep.subr.mxu0 0.0
    %475 = vmatpush1.msra.mxu0 %v278
    %476 = vmatprep.subr.mxu0 0.0
    %477 = vmatpush1.msra.mxu0 %v277
    %478 = vmatprep.subr.mxu0 0.0
    %479 = vmatpush1.msra.mxu0 %v276
    %480 = vmatprep.subr.mxu0 0.0
    %481 = vmatpush1.msra.mxu0 %v275
    %482 = vmatprep.subr.mxu0 0.0
    %483 = vmatpush1.msra.mxu0 %v274
    %484 = vmatprep.subr.mxu0 0.0
    %485 = vmatpush1.msra.mxu0 %v273
    %486 = vmatprep.subr.mxu0 0.0
    %487 = vmatpush1.msra.mxu0 %v272
    %488 = vmatprep.subr.mxu0 0.0
    %489 = vmatpush1.msra.mxu0 %v271
    %490 = vmatprep.subr.mxu0 0.0
    %491 = vmatpush1.msra.mxu0 %v270
    %492 = vmatprep.subr.mxu0 0.0
    %493 = vmatpush2.msra.mxu0 0.0
    %494 = vmatprep.subr.mxu0 0.0
    %495 = vmatpush2.msra.mxu0 0.0
    %496 = vmatprep.subr.mxu0 0.0
    %497 = vmatpush2.msra.mxu0 0.0
    %498 = vmatprep.subr.mxu0 0.0
    %499 = vmatpush2.msra.mxu0 0.0
    %500 = vmatprep.subr.mxu0 0.0
    %501 = vmatpush2.msra.mxu0 0.0
    %502 = vmatprep.subr.mxu0 0.0
    %503 = vmatpush2.msra.mxu0 0.0
    %504 = vmatprep.subr.mxu0 0.0
    %505 = vmatpush2.msra.mxu0 0.0
    %506 = vmatprep.subr.mxu0 0.0
    %507 = vmatpush2.msra.mxu0 0.0
    %508 = vmatprep.subr.mxu0 0.0
    %509 = vmatpush2.msra.mxu0 0.0
    %510 = vmatprep.subr.mxu0 0.0
    %511 = vmatpush2.msra.mxu0 0.0
    %512 = vmatprep.subr.mxu0 0.0
    %513 = vmatpush2.msra.mxu0 0.0
    %514 = vmatprep.subr.mxu0 0.0
    %515 = vmatpush2.msra.mxu0 0.0
    %516 = vmatprep.subr.mxu0 0.0
    %517 = vmatpush2.msra.mxu0 0.0
    %518 = vmatprep.subr.mxu0 0.0
    %519 = vmatpush2.msra.mxu0 0.0
    %520 = vmatprep.subr.mxu0 0.0
    %521 = vmatpush2.msra.mxu0 0.0
    %522 = vmatprep.subr.mxu0 0.0
    %523 = vmatpush2.msra.mxu0 0.0
    %524 = vmatprep.mubr.f32.mxu0 0.0
    %525 = vmatmul.mubr.f32.gmra.mxu0 %v456
    %v526 = vpop.f32.mrf.mxu0
    %v527 = vadd.f32 0.0, %v526
    %v528 = vpop.f32.mrf.mxu0
    %529 = vdwg.mxu0
    %s530 = scalar_lea.vmem [#allocation2], 8
    %v531 = vld [vmem:[%s530] sm:$0xf]
    %v532 = vmul.f32 %v531, %v527
    %v533 = vlog2.pop %v532
    %v534 = vmul.f32 %v533, 0.6931472
    %v535 = vadd.f32 %v459, %v534
    %v536 = vsel %vm367, %v532, -inf
    %537 = vmax.xlane.f32.xlu0 %v536
    %v538 = vpop.xlane.xlu0 %537
    %v539 = vrcp.pop %v538
    %v540 = vmul.f32 %v532, %v539
    %v541 = vlog2.pop %v539
    %v542 = vmul.f32 %v541, 0.6931472
    %v543 = vsub.f32 %v459, %v542
    %544 = vmatprep.subr.mxu0 0.0
    %545 = vmatpush1.msra.mxu0 %v285
    %546 = vmatprep.subr.mxu0 0.0
    %547 = vmatpush1.msra.mxu0 %v284
    %548 = vmatprep.subr.mxu0 0.0
    %549 = vmatpush1.msra.mxu0 %v283
    %550 = vmatprep.subr.mxu0 0.0
    %551 = vmatpush1.msra.mxu0 %v282
    %552 = vmatprep.subr.mxu0 0.0
    %553 = vmatpush1.msra.mxu0 %v281
    %554 = vmatprep.subr.mxu0 0.0
    %555 = vmatpush1.msra.mxu0 %v280
    %556 = vmatprep.subr.mxu0 0.0
    %557 = vmatpush1.msra.mxu0 %v279
    %558 = vmatprep.subr.mxu0 0.0
    %559 = vmatpush1.msra.mxu0 %v278
    %560 = vmatprep.subr.mxu0 0.0
    %561 = vmatpush1.msra.mxu0 %v277
    %562 = vmatprep.subr.mxu0 0.0
    %563 = vmatpush1.msra.mxu0 %v276
    %564 = vmatprep.subr.mxu0 0.0
    %565 = vmatpush1.msra.mxu0 %v275
    %566 = vmatprep.subr.mxu0 0.0
    %567 = vmatpush1.msra.mxu0 %v274
    %568 = vmatprep.subr.mxu0 0.0
    %569 = vmatpush1.msra.mxu0 %v273
    %570 = vmatprep.subr.mxu0 0.0
    %571 = vmatpush1.msra.mxu0 %v272
    %572 = vmatprep.subr.mxu0 0.0
    %573 = vmatpush1.msra.mxu0 %v271
    %574 = vmatprep.subr.mxu0 0.0
    %575 = vmatpush1.msra.mxu0 %v270
    %576 = vmatprep.subr.mxu0 0.0
    %577 = vmatpush2.msra.mxu0 0.0
    %578 = vmatprep.subr.mxu0 0.0
    %579 = vmatpush2.msra.mxu0 0.0
    %580 = vmatprep.subr.mxu0 0.0
    %581 = vmatpush2.msra.mxu0 0.0
    %582 = vmatprep.subr.mxu0 0.0
    %583 = vmatpush2.msra.mxu0 0.0
    %584 = vmatprep.subr.mxu0 0.0
    %585 = vmatpush2.msra.mxu0 0.0
    %586 = vmatprep.subr.mxu0 0.0
    %587 = vmatpush2.msra.mxu0 0.0
    %588 = vmatprep.subr.mxu0 0.0
    %589 = vmatpush2.msra.mxu0 0.0
    %590 = vmatprep.subr.mxu0 0.0
    %591 = vmatpush2.msra.mxu0 0.0
    %592 = vmatprep.subr.mxu0 0.0
    %593 = vmatpush2.msra.mxu0 0.0
    %594 = vmatprep.subr.mxu0 0.0
    %595 = vmatpush2.msra.mxu0 0.0
    %596 = vmatprep.subr.mxu0 0.0
    %597 = vmatpush2.msra.mxu0 0.0
    %598 = vmatprep.subr.mxu0 0.0
    %599 = vmatpush2.msra.mxu0 0.0
    %600 = vmatprep.subr.mxu0 0.0
    %601 = vmatpush2.msra.mxu0 0.0
    %602 = vmatprep.subr.mxu0 0.0
    %603 = vmatpush2.msra.mxu0 0.0
    %604 = vmatprep.subr.mxu0 0.0
    %605 = vmatpush2.msra.mxu0 0.0
    %606 = vmatprep.subr.mxu0 0.0
    %607 = vmatpush2.msra.mxu0 0.0
    %608 = vmatprep.mubr.f32.mxu0 0.0
    %609 = vmatmul.mubr.f32.gmra.mxu0 %v540
    %v610 = vpop.f32.mrf.mxu0
    %v611 = vadd.f32 0.0, %v610
    %v612 = vpop.f32.mrf.mxu0
    %613 = vdwg.mxu0
    %s614 = scalar_lea.vmem [#allocation2], 12
    %v615 = vld [vmem:[%s614] sm:$0xf]
    %v616 = vmul.f32 %v615, %v611
    %v617 = vlog2.pop %v616
    %v618 = vmul.f32 %v617, 0.6931472
    %v619 = vadd.f32 %v543, %v618
    %v620 = vsel %vm367, %v616, -inf
    %621 = vmax.xlane.f32.xlu0 %v620
    %v622 = vpop.xlane.xlu0 %621
    %v623 = vrcp.pop %v622
    %v624 = vmul.f32 %v616, %v623
    %v625 = vlog2.pop %v623
    %v626 = vmul.f32 %v625, 0.6931472
    %v627 = vsub.f32 %v543, %v626
    %628 = vmatprep.subr.mxu0 0.0
    %629 = vmatpush1.msra.mxu0 %v285
    %630 = vmatprep.subr.mxu0 0.0
    %631 = vmatpush1.msra.mxu0 %v284
    %632 = vmatprep.subr.mxu0 0.0
    %633 = vmatpush1.msra.mxu0 %v283
    %634 = vmatprep.subr.mxu0 0.0
    %635 = vmatpush1.msra.mxu0 %v282
    %636 = vmatprep.subr.mxu0 0.0
    %637 = vmatpush1.msra.mxu0 %v281
    %638 = vmatprep.subr.mxu0 0.0
    %639 = vmatpush1.msra.mxu0 %v280
    %640 = vmatprep.subr.mxu0 0.0
    %641 = vmatpush1.msra.mxu0 %v279
    %642 = vmatprep.subr.mxu0 0.0
    %643 = vmatpush1.msra.mxu0 %v278
    %644 = vmatprep.subr.mxu0 0.0
    %645 = vmatpush1.msra.mxu0 %v277
    %646 = vmatprep.subr.mxu0 0.0
    %647 = vmatpush1.msra.mxu0 %v276
    %648 = vmatprep.subr.mxu0 0.0
    %649 = vmatpush1.msra.mxu0 %v275
    %650 = vmatprep.subr.mxu0 0.0
    %651 = vmatpush1.msra.mxu0 %v274
    %652 = vmatprep.subr.mxu0 0.0
    %653 = vmatpush1.msra.mxu0 %v273
    %654 = vmatprep.subr.mxu0 0.0
    %655 = vmatpush1.msra.mxu0 %v272
    %656 = vmatprep.subr.mxu0 0.0
    %657 = vmatpush1.msra.mxu0 %v271
    %658 = vmatprep.subr.mxu0 0.0
    %659 = vmatpush1.msra.mxu0 %v270
    %660 = vmatprep.subr.mxu0 0.0
    %661 = vmatpush2.msra.mxu0 0.0
    %662 = vmatprep.subr.mxu0 0.0
    %663 = vmatpush2.msra.mxu0 0.0
    %664 = vmatprep.subr.mxu0 0.0
    %665 = vmatpush2.msra.mxu0 0.0
    %666 = vmatprep.subr.mxu0 0.0
    %667 = vmatpush2.msra.mxu0 0.0
    %668 = vmatprep.subr.mxu0 0.0
    %669 = vmatpush2.msra.mxu0 0.0
    %670 = vmatprep.subr.mxu0 0.0
    %671 = vmatpush2.msra.mxu0 0.0
    %672 = vmatprep.subr.mxu0 0.0
    %673 = vmatpush2.msra.mxu0 0.0
    %674 = vmatprep.subr.mxu0 0.0
    %675 = vmatpush2.msra.mxu0 0.0
    %676 = vmatprep.subr.mxu0 0.0
    %677 = vmatpush2.msra.mxu0 0.0
    %678 = vmatprep.subr.mxu0 0.0
    %679 = vmatpush2.msra.mxu0 0.0
    %680 = vmatprep.subr.mxu0 0.0
    %681 = vmatpush2.msra.mxu0 0.0
    %682 = vmatprep.subr.mxu0 0.0
    %683 = vmatpush2.msra.mxu0 0.0
    %684 = vmatprep.subr.mxu0 0.0
    %685 = vmatpush2.msra.mxu0 0.0
    %686 = vmatprep.subr.mxu0 0.0
    %687 = vmatpush2.msra.mxu0 0.0
    %688 = vmatprep.subr.mxu0 0.0
    %689 = vmatpush2.msra.mxu0 0.0
    %690 = vmatprep.subr.mxu0 0.0
    %691 = vmatpush2.msra.mxu0 0.0
    %692 = vmatprep.mubr.f32.mxu0 0.0
    %693 = vmatmul.mubr.f32.gmra.mxu0 %v624
    %v694 = vpop.f32.mrf.mxu0
    %v695 = vadd.f32 0.0, %v694
    %v696 = vpop.f32.mrf.mxu0
    %697 = vdwg.mxu0
    %s698 = scalar_lea.vmem [#allocation2], 16
    %v699 = vld [vmem:[%s698] sm:$0xf]
    %v700 = vmul.f32 %v699, %v695
    %v701 = vlog2.pop %v700
    %v702 = vmul.f32 %v701, 0.6931472
    %v703 = vadd.f32 %v627, %v702
    %v704 = vsel %vm367, %v700, -inf
    %705 = vmax.xlane.f32.xlu0 %v704
    %v706 = vpop.xlane.xlu0 %705
    %v707 = vrcp.pop %v706
    %v708 = vmul.f32 %v700, %v707
    %v709 = vlog2.pop %v707
    %v710 = vmul.f32 %v709, 0.6931472
    %v711 = vsub.f32 %v627, %v710
    %712 = vmatprep.subr.mxu0 0.0
    %713 = vmatpush1.msra.mxu0 %v285
    %714 = vmatprep.subr.mxu0 0.0
    %715 = vmatpush1.msra.mxu0 %v284
    %716 = vmatprep.subr.mxu0 0.0
    %717 = vmatpush1.msra.mxu0 %v283
    %718 = vmatprep.subr.mxu0 0.0
    %719 = vmatpush1.msra.mxu0 %v282
    %720 = vmatprep.subr.mxu0 0.0
    %721 = vmatpush1.msra.mxu0 %v281
    %722 = vmatprep.subr.mxu0 0.0
    %723 = vmatpush1.msra.mxu0 %v280
    %724 = vmatprep.subr.mxu0 0.0
    %725 = vmatpush1.msra.mxu0 %v279
    %726 = vmatprep.subr.mxu0 0.0
    %727 = vmatpush1.msra.mxu0 %v278
    %728 = vmatprep.subr.mxu0 0.0
    %729 = vmatpush1.msra.mxu0 %v277
    %730 = vmatprep.subr.mxu0 0.0
    %731 = vmatpush1.msra.mxu0 %v276
    %732 = vmatprep.subr.mxu0 0.0
    %733 = vmatpush1.msra.mxu0 %v275
    %734 = vmatprep.subr.mxu0 0.0
    %735 = vmatpush1.msra.mxu0 %v274
    %736 = vmatprep.subr.mxu0 0.0
    %737 = vmatpush1.msra.mxu0 %v273
    %738 = vmatprep.subr.mxu0 0.0
    %739 = vmatpush1.msra.mxu0 %v272
    %740 = vmatprep.subr.mxu0 0.0
    %741 = vmatpush1.msra.mxu0 %v271
    %742 = vmatprep.subr.mxu0 0.0
    %743 = vmatpush1.msra.mxu0 %v270
    %744 = vmatprep.subr.mxu0 0.0
    %745 = vmatpush2.msra.mxu0 0.0
    %746 = vmatprep.subr.mxu0 0.0
    %747 = vmatpush2.msra.mxu0 0.0
    %748 = vmatprep.subr.mxu0 0.0
    %749 = vmatpush2.msra.mxu0 0.0
    %750 = vmatprep.subr.mxu0 0.0
    %751 = vmatpush2.msra.mxu0 0.0
    %752 = vmatprep.subr.mxu0 0.0
    %753 = vmatpush2.msra.mxu0 0.0
    %754 = vmatprep.subr.mxu0 0.0
    %755 = vmatpush2.msra.mxu0 0.0
    %756 = vmatprep.subr.mxu0 0.0
    %757 = vmatpush2.msra.mxu0 0.0
    %758 = vmatprep.subr.mxu0 0.0
    %759 = vmatpush2.msra.mxu0 0.0
    %760 = vmatprep.subr.mxu0 0.0
    %761 = vmatpush2.msra.mxu0 0.0
    %762 = vmatprep.subr.mxu0 0.0
    %763 = vmatpush2.msra.mxu0 0.0
    %764 = vmatprep.subr.mxu0 0.0
    %765 = vmatpush2.msra.mxu0 0.0
    %766 = vmatprep.subr.mxu0 0.0
    %767 = vmatpush2.msra.mxu0 0.0
    %768 = vmatprep.subr.mxu0 0.0
    %769 = vmatpush2.msra.mxu0 0.0
    %770 = vmatprep.subr.mxu0 0.0
    %771 = vmatpush2.msra.mxu0 0.0
    %772 = vmatprep.subr.mxu0 0.0
    %773 = vmatpush2.msra.mxu0 0.0
    %774 = vmatprep.subr.mxu0 0.0
    %775 = vmatpush2.msra.mxu0 0.0
    %776 = vmatprep.mubr.f32.mxu0 0.0
    %777 = vmatmul.mubr.f32.gmra.mxu0 %v708
    %v778 = vpop.f32.mrf.mxu0
    %v779 = vadd.f32 0.0, %v778
    %v780 = vpop.f32.mrf.mxu0
    %781 = vdwg.mxu0
    %s782 = scalar_lea.vmem [#allocation2], 20
    %v783 = vld [vmem:[%s782] sm:$0xf]
    %v784 = vmul.f32 %v783, %v779
    %v785 = vlog2.pop %v784
    %v786 = vmul.f32 %v785, 0.6931472
    %v787 = vadd.f32 %v711, %v786
    %v788 = vsel %vm367, %v784, -inf
    %789 = vmax.xlane.f32.xlu0 %v788
    %v790 = vpop.xlane.xlu0 %789
    %v791 = vrcp.pop %v790
    %v792 = vmul.f32 %v784, %v791
    %v793 = vlog2.pop %v791
    %v794 = vmul.f32 %v793, 0.6931472
    %v795 = vsub.f32 %v711, %v794
    %796 = vmatprep.subr.mxu0 0.0
    %797 = vmatpush1.msra.mxu0 %v285
    %798 = vmatprep.subr.mxu0 0.0
    %799 = vmatpush1.msra.mxu0 %v284
    %800 = vmatprep.subr.mxu0 0.0
    %801 = vmatpush1.msra.mxu0 %v283
    %802 = vmatprep.subr.mxu0 0.0
    %803 = vmatpush1.msra.mxu0 %v282
    %804 = vmatprep.subr.mxu0 0.0
    %805 = vmatpush1.msra.mxu0 %v281
    %806 = vmatprep.subr.mxu0 0.0
    %807 = vmatpush1.msra.mxu0 %v280
    %808 = vmatprep.subr.mxu0 0.0
    %809 = vmatpush1.msra.mxu0 %v279
    %810 = vmatprep.subr.mxu0 0.0
    %811 = vmatpush1.msra.mxu0 %v278
    %812 = vmatprep.subr.mxu0 0.0
    %813 = vmatpush1.msra.mxu0 %v277
    %814 = vmatprep.subr.mxu0 0.0
    %815 = vmatpush1.msra.mxu0 %v276
    %816 = vmatprep.subr.mxu0 0.0
    %817 = vmatpush1.msra.mxu0 %v275
    %818 = vmatprep.subr.mxu0 0.0
    %819 = vmatpush1.msra.mxu0 %v274
    %820 = vmatprep.subr.mxu0 0.0
    %821 = vmatpush1.msra.mxu0 %v273
    %822 = vmatprep.subr.mxu0 0.0
    %823 = vmatpush1.msra.mxu0 %v272
    %824 = vmatprep.subr.mxu0 0.0
    %825 = vmatpush1.msra.mxu0 %v271
    %826 = vmatprep.subr.mxu0 0.0
    %827 = vmatpush1.msra.mxu0 %v270
    %828 = vmatprep.subr.mxu0 0.0
    %829 = vmatpush2.msra.mxu0 0.0
    %830 = vmatprep.subr.mxu0 0.0
    %831 = vmatpush2.msra.mxu0 0.0
    %832 = vmatprep.subr.mxu0 0.0
    %833 = vmatpush2.msra.mxu0 0.0
    %834 = vmatprep.subr.mxu0 0.0
    %835 = vmatpush2.msra.mxu0 0.0
    %836 = vmatprep.subr.mxu0 0.0
    %837 = vmatpush2.msra.mxu0 0.0
    %838 = vmatprep.subr.mxu0 0.0
    %839 = vmatpush2.msra.mxu0 0.0
    %840 = vmatprep.subr.mxu0 0.0
    %841 = vmatpush2.msra.mxu0 0.0
    %842 = vmatprep.subr.mxu0 0.0
    %843 = vmatpush2.msra.mxu0 0.0
    %844 = vmatprep.subr.mxu0 0.0
    %845 = vmatpush2.msra.mxu0 0.0
    %846 = vmatprep.subr.mxu0 0.0
    %847 = vmatpush2.msra.mxu0 0.0
    %848 = vmatprep.subr.mxu0 0.0
    %849 = vmatpush2.msra.mxu0 0.0
    %850 = vmatprep.subr.mxu0 0.0
    %851 = vmatpush2.msra.mxu0 0.0
    %852 = vmatprep.subr.mxu0 0.0
    %853 = vmatpush2.msra.mxu0 0.0
    %854 = vmatprep.subr.mxu0 0.0
    %855 = vmatpush2.msra.mxu0 0.0
    %856 = vmatprep.subr.mxu0 0.0
    %857 = vmatpush2.msra.mxu0 0.0
    %858 = vmatprep.subr.mxu0 0.0
    %859 = vmatpush2.msra.mxu0 0.0
    %860 = vmatprep.mubr.f32.mxu0 0.0
    %861 = vmatmul.mubr.f32.gmra.mxu0 %v792
    %v862 = vpop.f32.mrf.mxu0
    %v863 = vadd.f32 0.0, %v862
    %v864 = vpop.f32.mrf.mxu0
    %865 = vdwg.mxu0
    %s866 = scalar_lea.vmem [#allocation2], 24
    %v867 = vld [vmem:[%s866] sm:$0xf]
    %v868 = vmul.f32 %v867, %v863
    %v869 = vlog2.pop %v868
    %v870 = vmul.f32 %v869, 0.6931472
    %v871 = vadd.f32 %v795, %v870
    %v872 = vsel %vm367, %v868, -inf
    %873 = vmax.xlane.f32.xlu0 %v872
    %v874 = vpop.xlane.xlu0 %873
    %v875 = vrcp.pop %v874
    %v876 = vmul.f32 %v868, %v875
    %v877 = vlog2.pop %v875
    %v878 = vmul.f32 %v877, 0.6931472
    %v879 = vsub.f32 %v795, %v878
    %880 = vmatprep.subr.mxu0 0.0
    %881 = vmatpush1.msra.mxu0 %v285
    %882 = vmatprep.subr.mxu0 0.0
    %883 = vmatpush1.msra.mxu0 %v284
    %884 = vmatprep.subr.mxu0 0.0
    %885 = vmatpush1.msra.mxu0 %v283
    %886 = vmatprep.subr.mxu0 0.0
    %887 = vmatpush1.msra.mxu0 %v282
    %888 = vmatprep.subr.mxu0 0.0
    %889 = vmatpush1.msra.mxu0 %v281
    %890 = vmatprep.subr.mxu0 0.0
    %891 = vmatpush1.msra.mxu0 %v280
    %892 = vmatprep.subr.mxu0 0.0
    %893 = vmatpush1.msra.mxu0 %v279
    %894 = vmatprep.subr.mxu0 0.0
    %895 = vmatpush1.msra.mxu0 %v278
    %896 = vmatprep.subr.mxu0 0.0
    %897 = vmatpush1.msra.mxu0 %v277
    %898 = vmatprep.subr.mxu0 0.0
    %899 = vmatpush1.msra.mxu0 %v276
    %900 = vmatprep.subr.mxu0 0.0
    %901 = vmatpush1.msra.mxu0 %v275
    %902 = vmatprep.subr.mxu0 0.0
    %903 = vmatpush1.msra.mxu0 %v274
    %904 = vmatprep.subr.mxu0 0.0
    %905 = vmatpush1.msra.mxu0 %v273
    %906 = vmatprep.subr.mxu0 0.0
    %907 = vmatpush1.msra.mxu0 %v272
    %908 = vmatprep.subr.mxu0 0.0
    %909 = vmatpush1.msra.mxu0 %v271
    %910 = vmatprep.subr.mxu0 0.0
    %911 = vmatpush1.msra.mxu0 %v270
    %912 = vmatprep.subr.mxu0 0.0
    %913 = vmatpush2.msra.mxu0 0.0
    %914 = vmatprep.subr.mxu0 0.0
    %915 = vmatpush2.msra.mxu0 0.0
    %916 = vmatprep.subr.mxu0 0.0
    %917 = vmatpush2.msra.mxu0 0.0
    %918 = vmatprep.subr.mxu0 0.0
    %919 = vmatpush2.msra.mxu0 0.0
    %920 = vmatprep.subr.mxu0 0.0
    %921 = vmatpush2.msra.mxu0 0.0
    %922 = vmatprep.subr.mxu0 0.0
    %923 = vmatpush2.msra.mxu0 0.0
    %924 = vmatprep.subr.mxu0 0.0
    %925 = vmatpush2.msra.mxu0 0.0
    %926 = vmatprep.subr.mxu0 0.0
    %927 = vmatpush2.msra.mxu0 0.0
    %928 = vmatprep.subr.mxu0 0.0
    %929 = vmatpush2.msra.mxu0 0.0
    %930 = vmatprep.subr.mxu0 0.0
    %931 = vmatpush2.msra.mxu0 0.0
    %932 = vmatprep.subr.mxu0 0.0
    %933 = vmatpush2.msra.mxu0 0.0
    %934 = vmatprep.subr.mxu0 0.0
    %935 = vmatpush2.msra.mxu0 0.0
    %936 = vmatprep.subr.mxu0 0.0
    %937 = vmatpush2.msra.mxu0 0.0
    %938 = vmatprep.subr.mxu0 0.0
    %939 = vmatpush2.msra.mxu0 0.0
    %940 = vmatprep.subr.mxu0 0.0
    %941 = vmatpush2.msra.mxu0 0.0
    %942 = vmatprep.subr.mxu0 0.0
    %943 = vmatpush2.msra.mxu0 0.0
    %944 = vmatprep.mubr.f32.mxu0 0.0
    %945 = vmatmul.mubr.f32.gmra.mxu0 %v876
    %v946 = vpop.f32.mrf.mxu0
    %v947 = vadd.f32 0.0, %v946
    %v948 = vpop.f32.mrf.mxu0
    %949 = vdwg.mxu0
    %s950 = scalar_lea.vmem [#allocation2], 28
    %v951 = vld [vmem:[%s950] sm:$0xf]
    %v952 = vmul.f32 %v951, %v947
    %v953 = vlog2.pop %v952
    %v954 = vmul.f32 %v953, 0.6931472
    %v955 = vadd.f32 %v879, %v954
    %v956 = vsel %vm367, %v952, -inf
    %957 = vmax.xlane.f32.xlu0 %v956
    %v958 = vpop.xlane.xlu0 %957
    %v959 = vrcp.pop %v958
    %v960 = vmul.f32 %v952, %v959
    %v961 = vlog2.pop %v959
    %v962 = vmul.f32 %v961, 0.6931472
    %v963 = vsub.f32 %v879, %v962
    %v966 = vunpack.c.l.s4 1966171168
    %v967 = vunpack.c.0.s8 %v966
    %v968 = vlaneseq
    %v969 = vshrl.u32 %v968, 7
    %v970 = vsub.s32 %v967, %v969
    %v971 = vrot.slane %v366, %v970
    %v972 = vcombine.high %v971, %v971
    %v974 = vunpack.c.l.s4 1966171168
    %v975 = vunpack.c.0.s8 %v974
    %v976 = vlaneseq
    %v977 = vshrl.u32 %v976, 7
    %v978 = vsub.s32 %v975, %v977
    %v979 = vrot.slane %v971, %v978
    %v981 = vunpack.c.l.s4 1966171168
    %v982 = vunpack.c.0.s8 %v981
    %v983 = vlaneseq
    %v984 = vshrl.u32 %v983, 7
    %v985 = vsub.s32 %v982, %v984
    %v986 = vrot.slane %v972, %v985
    %v987 = vcombine.high %v979, %v979
    %v988 = vcombine.high %v986, %v986
    %v995 = vunpack.c.l.s4 1966171168
    %v996 = vunpack.c.0.s8 %v995
    %v997 = vlaneseq
    %v998 = vshrl.u32 %v997, 7
    %v999 = vsub.s32 %v996, %v998
    %v1000 = vrot.slane %v451, %v999
    %v1001 = vcombine.high %v1000, %v1000
    %v1003 = vunpack.c.l.s4 1966171168
    %v1004 = vunpack.c.0.s8 %v1003
    %v1005 = vlaneseq
    %v1006 = vshrl.u32 %v1005, 7
    %v1007 = vsub.s32 %v1004, %v1006
    %v1008 = vrot.slane %v1000, %v1007
    %v1010 = vunpack.c.l.s4 1966171168
    %v1011 = vunpack.c.0.s8 %v1010
    %v1012 = vlaneseq
    %v1013 = vshrl.u32 %v1012, 7
    %v1014 = vsub.s32 %v1011, %v1013
    %v1015 = vrot.slane %v1001, %v1014
    %v1016 = vcombine.high %v1008, %v1008
    %v1017 = vcombine.high %v1015, %v1015
    %v1020 = vunpack.c.l.s4 1966171168
    %v1021 = vunpack.c.0.s8 %v1020
    %v1022 = vlaneseq
    %v1023 = vshrl.u32 %v1022, 7
    %v1024 = vsub.s32 %v1021, %v1023
    %v1025 = vrot.slane %v535, %v1024
    %v1026 = vcombine.high %v1025, %v1025
    %v1028 = vunpack.c.l.s4 1966171168
    %v1029 = vunpack.c.0.s8 %v1028
    %v1030 = vlaneseq
    %v1031 = vshrl.u32 %v1030, 7
    %v1032 = vsub.s32 %v1029, %v1031
    %v1033 = vrot.slane %v1025, %v1032
    %v1035 = vunpack.c.l.s4 1966171168
    %v1036 = vunpack.c.0.s8 %v1035
    %v1037 = vlaneseq
    %v1038 = vshrl.u32 %v1037, 7
    %v1039 = vsub.s32 %v1036, %v1038
    %v1040 = vrot.slane %v1026, %v1039
    %v1041 = vcombine.high %v1033, %v1033
    %v1042 = vcombine.high %v1040, %v1040
    %v1045 = vunpack.c.l.s4 1966171168
    %v1046 = vunpack.c.0.s8 %v1045
    %v1047 = vlaneseq
    %v1048 = vshrl.u32 %v1047, 7
    %v1049 = vsub.s32 %v1046, %v1048
    %v1050 = vrot.slane %v619, %v1049
    %v1051 = vcombine.high %v1050, %v1050
    %v1053 = vunpack.c.l.s4 1966171168
    %v1054 = vunpack.c.0.s8 %v1053
    %v1055 = vlaneseq
    %v1056 = vshrl.u32 %v1055, 7
    %v1057 = vsub.s32 %v1054, %v1056
    %v1058 = vrot.slane %v1050, %v1057
    %v1060 = vunpack.c.l.s4 1966171168
    %v1061 = vunpack.c.0.s8 %v1060
    %v1062 = vlaneseq
    %v1063 = vshrl.u32 %v1062, 7
    %v1064 = vsub.s32 %v1061, %v1063
    %v1065 = vrot.slane %v1051, %v1064
    %v1066 = vcombine.high %v1058, %v1058
    %v1067 = vcombine.high %v1065, %v1065
    %v1070 = vunpack.c.l.s4 1966171168
    %v1071 = vunpack.c.0.s8 %v1070
    %v1072 = vlaneseq
    %v1073 = vshrl.u32 %v1072, 7
    %v1074 = vsub.s32 %v1071, %v1073
    %v1075 = vrot.slane %v703, %v1074
    %v1076 = vcombine.high %v1075, %v1075
    %v1078 = vunpack.c.l.s4 1966171168
    %v1079 = vunpack.c.0.s8 %v1078
    %v1080 = vlaneseq
    %v1081 = vshrl.u32 %v1080, 7
    %v1082 = vsub.s32 %v1079, %v1081
    %v1083 = vrot.slane %v1075, %v1082
    %v1085 = vunpack.c.l.s4 1966171168
    %v1086 = vunpack.c.0.s8 %v1085
    %v1087 = vlaneseq
    %v1088 = vshrl.u32 %v1087, 7
    %v1089 = vsub.s32 %v1086, %v1088
    %v1090 = vrot.slane %v1076, %v1089
    %v1091 = vcombine.high %v1083, %v1083
    %v1092 = vcombine.high %v1090, %v1090
    %v1095 = vunpack.c.l.s4 1966171168
    %v1096 = vunpack.c.0.s8 %v1095
    %v1097 = vlaneseq
    %v1098 = vshrl.u32 %v1097, 7
    %v1099 = vsub.s32 %v1096, %v1098
    %v1100 = vrot.slane %v787, %v1099
    %v1101 = vcombine.high %v1100, %v1100
    %v1103 = vunpack.c.l.s4 1966171168
    %v1104 = vunpack.c.0.s8 %v1103
    %v1105 = vlaneseq
    %v1106 = vshrl.u32 %v1105, 7
    %v1107 = vsub.s32 %v1104, %v1106
    %v1108 = vrot.slane %v1100, %v1107
    %v1110 = vunpack.c.l.s4 1966171168
    %v1111 = vunpack.c.0.s8 %v1110
    %v1112 = vlaneseq
    %v1113 = vshrl.u32 %v1112, 7
    %v1114 = vsub.s32 %v1111, %v1113
    %v1115 = vrot.slane %v1101, %v1114
    %v1116 = vcombine.high %v1108, %v1108
    %v1117 = vcombine.high %v1115, %v1115
    %v1120 = vunpack.c.l.s4 1966171168
    %v1121 = vunpack.c.0.s8 %v1120
    %v1122 = vlaneseq
    %v1123 = vshrl.u32 %v1122, 7
    %v1124 = vsub.s32 %v1121, %v1123
    %v1125 = vrot.slane %v871, %v1124
    %v1126 = vcombine.high %v1125, %v1125
    %v1128 = vunpack.c.l.s4 1966171168
    %v1129 = vunpack.c.0.s8 %v1128
    %v1130 = vlaneseq
    %v1131 = vshrl.u32 %v1130, 7
    %v1132 = vsub.s32 %v1129, %v1131
    %v1133 = vrot.slane %v1125, %v1132
    %v1135 = vunpack.c.l.s4 1966171168
    %v1136 = vunpack.c.0.s8 %v1135
    %v1137 = vlaneseq
    %v1138 = vshrl.u32 %v1137, 7
    %v1139 = vsub.s32 %v1136, %v1138
    %v1140 = vrot.slane %v1126, %v1139
    %v1141 = vcombine.high %v1133, %v1133
    %v1142 = vcombine.high %v1140, %v1140
    %v1145 = vunpack.c.l.s4 1966171168
    %v1146 = vunpack.c.0.s8 %v1145
    %v1147 = vlaneseq
    %v1148 = vshrl.u32 %v1147, 7
    %v1149 = vsub.s32 %v1146, %v1148
    %v1150 = vrot.slane %v955, %v1149
    %v1151 = vcombine.high %v1150, %v1150
    %v1153 = vunpack.c.l.s4 1966171168
    %v1154 = vunpack.c.0.s8 %v1153
    %v1155 = vlaneseq
    %v1156 = vshrl.u32 %v1155, 7
    %v1157 = vsub.s32 %v1154, %v1156
    %v1158 = vrot.slane %v1150, %v1157
    %v1160 = vunpack.c.l.s4 1966171168
    %v1161 = vunpack.c.0.s8 %v1160
    %v1162 = vlaneseq
    %v1163 = vshrl.u32 %v1162, 7
    %v1164 = vsub.s32 %v1161, %v1163
    %v1165 = vrot.slane %v1151, %v1164
    %v1166 = vcombine.high %v1158, %v1158
    %v1167 = vcombine.high %v1165, %v1165
    %v1168 = vlaneseq
    %v1169 = vshrl.u32 %v1168, 7
    %v1170 = vsub.s32 0, %v1169
    %v1171 = vrot.slane %v1008, %v1170
    %v1172 = vlaneseq
    %v1173 = vshrl.u32 %v1172, 7
    %v1174 = vsub.s32 0, %v1173
    %v1175 = vrot.slane %v1015, %v1174
    %v1176 = vlaneseq
    %v1177 = vshrl.u32 %v1176, 7
    %v1178 = vsub.s32 0, %v1177
    %v1179 = vrot.slane %v1016, %v1178
    %v1180 = vlaneseq
    %v1181 = vshrl.u32 %v1180, 7
    %v1182 = vsub.s32 0, %v1181
    %v1183 = vrot.slane %v1017, %v1182
    %v1188 = vlaneseq
    %v1189 = vshrl.u32 %v1188, 7
    %v1190 = vsub.s32 0, %v1189
    %v1191 = vrot.slane %v1033, %v1190
    %v1192 = vlaneseq
    %v1193 = vshrl.u32 %v1192, 7
    %v1194 = vsub.s32 0, %v1193
    %v1195 = vrot.slane %v1040, %v1194
    %v1196 = vlaneseq
    %v1197 = vshrl.u32 %v1196, 7
    %v1198 = vsub.s32 0, %v1197
    %v1199 = vrot.slane %v1041, %v1198
    %v1200 = vlaneseq
    %v1201 = vshrl.u32 %v1200, 7
    %v1202 = vsub.s32 0, %v1201
    %v1203 = vrot.slane %v1042, %v1202
    %v1208 = vlaneseq
    %v1209 = vshrl.u32 %v1208, 7
    %v1210 = vsub.s32 0, %v1209
    %v1211 = vrot.slane %v1058, %v1210
    %v1212 = vlaneseq
    %v1213 = vshrl.u32 %v1212, 7
    %v1214 = vsub.s32 0, %v1213
    %v1215 = vrot.slane %v1065, %v1214
    %v1216 = vlaneseq
    %v1217 = vshrl.u32 %v1216, 7
    %v1218 = vsub.s32 0, %v1217
    %v1219 = vrot.slane %v1066, %v1218
    %v1220 = vlaneseq
    %v1221 = vshrl.u32 %v1220, 7
    %v1222 = vsub.s32 0, %v1221
    %v1223 = vrot.slane %v1067, %v1222
    %v1228 = vlaneseq
    %v1229 = vshrl.u32 %v1228, 7
    %v1230 = vsub.s32 0, %v1229
    %v1231 = vrot.slane %v1083, %v1230
    %v1232 = vlaneseq
    %v1233 = vshrl.u32 %v1232, 7
    %v1234 = vsub.s32 0, %v1233
    %v1235 = vrot.slane %v1090, %v1234
    %v1236 = vlaneseq
    %v1237 = vshrl.u32 %v1236, 7
    %v1238 = vsub.s32 0, %v1237
    %v1239 = vrot.slane %v1091, %v1238
    %v1240 = vlaneseq
    %v1241 = vshrl.u32 %v1240, 7
    %v1242 = vsub.s32 0, %v1241
    %v1243 = vrot.slane %v1092, %v1242
    %v1248 = vlaneseq
    %v1249 = vshrl.u32 %v1248, 7
    %v1250 = vsub.s32 0, %v1249
    %v1251 = vrot.slane %v1108, %v1250
    %v1252 = vlaneseq
    %v1253 = vshrl.u32 %v1252, 7
    %v1254 = vsub.s32 0, %v1253
    %v1255 = vrot.slane %v1115, %v1254
    %v1256 = vlaneseq
    %v1257 = vshrl.u32 %v1256, 7
    %v1258 = vsub.s32 0, %v1257
    %v1259 = vrot.slane %v1116, %v1258
    %v1260 = vlaneseq
    %v1261 = vshrl.u32 %v1260, 7
    %v1262 = vsub.s32 0, %v1261
    %v1263 = vrot.slane %v1117, %v1262
    %v1268 = vlaneseq
    %v1269 = vshrl.u32 %v1268, 7
    %v1270 = vsub.s32 0, %v1269
    %v1271 = vrot.slane %v1133, %v1270
    %v1272 = vlaneseq
    %v1273 = vshrl.u32 %v1272, 7
    %v1274 = vsub.s32 0, %v1273
    %v1275 = vrot.slane %v1140, %v1274
    %v1276 = vlaneseq
    %v1277 = vshrl.u32 %v1276, 7
    %v1278 = vsub.s32 0, %v1277
    %v1279 = vrot.slane %v1141, %v1278
    %v1280 = vlaneseq
    %v1281 = vshrl.u32 %v1280, 7
    %v1282 = vsub.s32 0, %v1281
    %v1283 = vrot.slane %v1142, %v1282
    %v1288 = vlaneseq
    %v1289 = vshrl.u32 %v1288, 7
    %v1290 = vsub.s32 0, %v1289
    %v1291 = vrot.slane %v1158, %v1290
    %v1292 = vlaneseq
    %v1293 = vshrl.u32 %v1292, 7
    %v1294 = vsub.s32 0, %v1293
    %v1295 = vrot.slane %v1165, %v1294
    %v1296 = vlaneseq
    %v1297 = vshrl.u32 %v1296, 7
    %v1298 = vsub.s32 0, %v1297
    %v1299 = vrot.slane %v1166, %v1298
    %v1300 = vlaneseq
    %v1301 = vshrl.u32 %v1300, 7
    %v1302 = vsub.s32 0, %v1301
    %v1303 = vrot.slane %v1167, %v1302
    %vm1308 = vcmask 1040384
    %v1309 = vsel %vm1308, %v979, %v1171
    %v1310 = vsel %vm1308, %v986, %v1175
    %v1311 = vsel %vm1308, %v987, %v1179
    %v1312 = vsel %vm1308, %v988, %v1183
    %vm1313 = vcmask 1041408
    %v1314 = vsel %vm1313, %v1309, %v1191
    %v1315 = vsel %vm1313, %v1310, %v1195
    %v1316 = vsel %vm1313, %v1311, %v1199
    %v1317 = vsel %vm1313, %v1312, %v1203
    %vm1318 = vcmask 1042432
    %v1319 = vsel %vm1318, %v1314, %v1211
    %v1320 = vsel %vm1318, %v1315, %v1215
    %v1321 = vsel %vm1318, %v1316, %v1219
    %v1322 = vsel %vm1318, %v1317, %v1223
    %v1323 = vsel %vm367, %v1319, %v1231
    %v1324 = vsel %vm367, %v1320, %v1235
    %v1325 = vsel %vm367, %v1321, %v1239
    %v1326 = vsel %vm367, %v1322, %v1243
    %vm1327 = vcmask 1044480
    %v1328 = vsel %vm1327, %v1323, %v1251
    %v1329 = vsel %vm1327, %v1324, %v1255
    %v1330 = vsel %vm1327, %v1325, %v1259
    %v1331 = vsel %vm1327, %v1326, %v1263
    %vm1332 = vcmask 1045504
    %v1333 = vsel %vm1332, %v1328, %v1271
    %v1334 = vsel %vm1332, %v1329, %v1275
    %v1335 = vsel %vm1332, %v1330, %v1279
    %v1336 = vsel %vm1332, %v1331, %v1283
    %vm1337 = vcmask 1046528
    %v1338 = vsel %vm1337, %v1333, %v1291
    %v1339 = vsel %vm1337, %v1334, %v1295
    %v1340 = vsel %vm1337, %v1335, %v1299
    %v1341 = vsel %vm1337, %v1336, %v1303
    %1342 = vst [vmem:[#allocation10] sm:$0xff] %v1338
    %1343 = vst [vmem:[#allocation10 + $0x8] sm:$0xff] %v1339
    %1344 = vst [vmem:[#allocation10 + $0x10] sm:$0xff] %v1340
    %1345 = vst [vmem:[#allocation10 + $0x18] sm:$0xff] %v1341
    %1346 = vst [vmem:[#allocation3] sm:$0xf] %v960
    %1347 = vst [vmem:[#allocation4] sm:$0xf] %v963
    // Predicated region
    $region30: #{tpu_custom_call.1} parent=1 // pred_check
      _
    $region31: #{tpu_custom_call.1} parent=1 // pred_check_branch
      %1349 = sbr.rel (0) target = $region33
    $region32: #{tpu_custom_call.1} parent=1 // pred_region
      %s1351 = ssub.s32 512, 512
      %1352 = vsyncadd [#allocation7], %s1351
      %s1353 = sshll.u32 [#allocation10], 4
      %s1354 = int_to_ptr.vmem [resolvable:$true] %s1353
      %1359 = dma.vmem_to_hbm [thread:$0]  %s1354, 512, %s4, [#allocation7], 128, 128, 8
    $region33: #{tpu_custom_call.1} parent=1 // pred_fallthru
      _
    // Predicated region
    $region34: #{tpu_custom_call.1} parent=1 // pred_check
      _
    $region35: #{tpu_custom_call.1} parent=1 // pred_check_branch
      %1361 = sbr.rel (0) target = $region37
    $region36: #{tpu_custom_call.1} parent=1 // pred_region
      %1362 = dma.done [#allocation7], 512
    $region37: #{tpu_custom_call.1} parent=1 // pred_fallthru
      _
    %1363 = vsyncpa [#allocation6], 1
    %1364 = vsyncpa [#allocation9], 1
    %1365 = vsyncpa [#allocation7], 1

</llo_original>
